<compile_context>
chip_gen: v6e
topology: v6e:2x2x1
jax: 0.10.0
libtpu: 0.0.40
codegen_flags: <defaults>
</compile_context>

<pallas_src>
import numpy as np

import jax
import jax.numpy as jnp
from jax.experimental import pallas as pl
from jax.experimental.pallas import tpu as pltpu


# ----------------------------------------------------------------------------
# Weight repacking (wrapper side, once per spatial shape).
# ----------------------------------------------------------------------------
def _conv_out(n):
    return (n - 1) // 2 + 1            # 3x3 kernel, stride 2, pad 1


def _sel(n_out, n_in, k):
    """sel[o, i] = 1 iff i == 2*o + k - 1 (k-th tap of a 3x3/s2/pad1 conv)."""
    m = np.zeros((n_out, n_in), np.float32)
    for o in range(n_out):
        i = 2 * o + k - 1
        if 0 <= i < n_in:
            m[o, i] = 1.0
    return m


def _pack_conv3x3_s2(w, b, H, W):
    """w: (Cout, Cin, 3, 3), b: (Cout,)  ->
       A (3, Cout*Ho, Cin*H) bf16, S (3, W, Wo) bf16, b_col (Cout*Ho, 1) f32.
    With Z2[(ci*H + r), c] = z[ci, r, c]:
       conv(z)[co, i, j] = (sum_kj A[kj] @ (Z2 @ S[kj]) + b_col)[co*Ho + i, j].
    """
    Cout, Cin = w.shape[0], w.shape[1]
    Ho, Wo = _conv_out(H), _conv_out(W)
    A, S = [], []
    for kj in range(3):
        a = jnp.zeros((Cout * Ho, Cin * H), jnp.float32)
        for ki in range(3):
            a = a + jnp.kron(w[:, :, ki, kj], jnp.asarray(_sel(Ho, H, ki)))
        A.append(a)
        S.append(jnp.asarray(_sel(Wo, W, kj)).T)
    A = jnp.stack(A).astype(jnp.bfloat16)
    S = jnp.stack(S).astype(jnp.bfloat16)
    b_col = jnp.repeat(b, Ho).reshape(Cout * Ho, 1).astype(jnp.float32)
    return A, S, b_col, Ho, Wo


# ----------------------------------------------------------------------------
# Fused kernel: per-image conv1+SiLU -> conv2+SiLU -> 1x1 head, all in VMEM.
# ----------------------------------------------------------------------------
def _silu(v, out_dtype):
    # f32 SiLU epilogue; divide routed to the EUP approx-reciprocal slot,
    # bf16 cast folded into the same pass.
    s = pl.reciprocal(1.0 + jnp.exp(-v), approx=True)
    return (v * s).astype(out_dtype)


def _fused_yolo_kernel(x_ref, a1_ref, s1_ref, b1_ref, a2_ref, s2_ref, b2_ref,
                       a3_ref, b3_ref, o_ref):
    def conv3x3_s2(z, a_ref, s_ref, b_ref):
        out = None
        for kj in range(3):                        # static 3-tap loop (unrolled)
            tap = jnp.dot(z, s_ref[kj],
                          preferred_element_type=jnp.float32).astype(jnp.bfloat16)
            term = jnp.dot(a_ref[kj], tap, preferred_element_type=jnp.float32)
            out = term if out is None else out + term
        return out + b_ref[...]                    # (Cout*Ho, 1) lane-broadcast

    z = x_ref[...]                                                # (Cin*H, W) bf16
    h1 = _silu(conv3x3_s2(z, a1_ref, s1_ref, b1_ref), jnp.bfloat16)   # (C1*Ho1, Wo1)
    h2 = _silu(conv3x3_s2(h1, a2_ref, s2_ref, b2_ref), jnp.bfloat16)  # (C2*Ho2, Wo2)
    out = jnp.dot(a3_ref[...], h2, preferred_element_type=jnp.float32)
    o_ref[...] = (out + b3_ref[...]).astype(o_ref.dtype)


def _resident(arr):
    """Full-array block with a constant index_map (stays resident across grid)."""
    if arr.ndim == 3:
        return pl.BlockSpec(arr.shape, lambda b: (0, 0, 0))
    return pl.BlockSpec(arr.shape, lambda b: (0, 0))


def fused_yolo_forward(x2d, A1, S1, b1, A2, S2, b2, A3, b3, out_rows, out_cols):
    """x2d: (B, Cin*H, W) bf16 -> (B, out_rows, out_cols) f32; grid over batch."""
    B, rows_in, w_in = x2d.shape
    return pl.pallas_call(
        _fused_yolo_kernel,
        out_shape=jax.ShapeDtypeStruct((B, out_rows, out_cols), jnp.float32),
        grid_spec=pltpu.PrefetchScalarGridSpec(
            num_scalar_prefetch=0,
            grid=(B,),                     # B >= 2 -> both v7x TCs get work
            in_specs=[
                pl.BlockSpec((None, rows_in, w_in), lambda b: (b, 0, 0)),
                _resident(A1), _resident(S1), _resident(b1),
                _resident(A2), _resident(S2), _resident(b2),
                _resident(A3), _resident(b3),
            ],
            out_specs=pl.BlockSpec((None, out_rows, out_cols),
                                   lambda b: (b, 0, 0)),
        ),
        compiler_params=pltpu.CompilerParams(
            dimension_semantics=("parallel",)),
    )(x2d, A1, S1, b1, A2, S2, b2, A3, b3)


# ----------------------------------------------------------------------------
# CustomYOLOPipeline equivalent
# ----------------------------------------------------------------------------
class CustomYOLOPipelinePallas:
    def __init__(self, key, in_channels=4, c1=16, c2=32, num_classes=1):
        self.stride = 32
        self.names = {"car": 2}
        self.in_channels, self.c1, self.c2 = in_channels, c1, c2
        head_out = 5 + num_classes          # (x, y, w, h, obj) + classes per cell
        k1, k2, k3, k4, k5, k6 = jax.random.split(key, 6)
        s = 0.1
        self.w1 = s * jax.random.normal(k1, (c1, in_channels, 3, 3), jnp.float32)
        self.b1 = s * jax.random.normal(k2, (c1,), jnp.float32)
        self.w2 = s * jax.random.normal(k3, (c2, c1, 3, 3), jnp.float32)
        self.b2 = s * jax.random.normal(k4, (c2,), jnp.float32)
        self.w3 = s * jax.random.normal(k5, (head_out, c2, 1, 1), jnp.float32)
        self.b3 = s * jax.random.normal(k6, (head_out,), jnp.float32)
        self._pack_cache = {}

    def fuse(self, verbose=False):
        if verbose:
            print("Fusion is not needed for CustomYOLOPipeline. Returning self.")
        return self

    def _pack(self, H, W):
        key = (H, W)
        if key not in self._pack_cache:
            head_out, c2 = self.w3.shape[0], self.w3.shape[1]
            A1, S1, b1c, Ho1, Wo1 = _pack_conv3x3_s2(self.w1, self.b1, H, W)
            A2, S2, b2c, Ho2, Wo2 = _pack_conv3x3_s2(self.w2, self.b2, Ho1, Wo1)
            A3 = jnp.kron(self.w3.reshape(head_out, c2),
                          jnp.eye(Ho2, dtype=jnp.float32)).astype(jnp.bfloat16)
            b3c = jnp.repeat(self.b3, Ho2).reshape(head_out * Ho2, 1)
            b3c = b3c.astype(jnp.float32)
            self._pack_cache[key] = (A1, S1, b1c, A2, S2, b2c, A3, b3c, Ho2, Wo2)
        return self._pack_cache[key]

    def __call__(self, x):
        # forward(x) == self.yolo(x)
        B, Cin, H, W = x.shape
        head_out = self.w3.shape[0]
        A1, S1, b1c, A2, S2, b2c, A3, b3c, Ho2, Wo2 = self._pack(H, W)
        # NCHW -> channel-row-major 2-D per image: a free reshape, no transpose.
        x2d = x.reshape(B, Cin * H, W).astype(jnp.bfloat16)
        out2d = fused_yolo_forward(x2d, A1, S1, b1c, A2, S2, b2c, A3, b3c,
                                   head_out * Ho2, Wo2)
        return out2d.reshape(B, head_out, Ho2, Wo2)


# Pure-JAX reference of the same synthetic forward (for correctness checking).
def _reference_forward(x, m):
    def conv(z, w, b, stride, pad):
        y = jax.lax.conv_general_dilated(
            z, w, window_strides=(stride, stride),
            padding=((pad, pad), (pad, pad)),
            dimension_numbers=("NCHW", "OIHW", "NCHW"))
        return y + b[None, :, None, None]

    h = conv(x, m.w1, m.b1, 2, 1)
    h = h * jax.nn.sigmoid(h)
    h = conv(h, m.w2, m.b2, 2, 1)
    h = h * jax.nn.sigmoid(h)
    return conv(h, m.w3, m.b3, 1, 0)


if __name__ == "__main__":
    key = jax.random.PRNGKey(0)
    k_model, k_x = jax.random.split(key)

    model = CustomYOLOPipelinePallas(k_model, in_channels=4, c1=16, c2=32,
                                     num_classes=1).fuse()

    # NCHW input, matching the PyTorch convention.
    x = jax.random.normal(k_x, (2, 4, 16, 16), jnp.float32)

    out = jax.block_until_ready(model(x))
    assert out.shape == (2, 6, 4, 4), out.shape
    assert bool(jnp.all(jnp.isfinite(out)))

    ref = jax.block_until_ready(_reference_forward(x, model))
    max_err = float(jnp.max(jnp.abs(out - ref)))
    assert max_err < 3e-2, f"max abs error vs reference: {max_err}"

    print("KERNEL_OK")
</pallas_src>

<mosaic_0001>
module attributes {stable_mosaic.version = 11 : i64} {
  func.func @_fused_yolo_kernel(%arg0: i32, %arg1: memref<1x64x16xbf16, #tpu.memory_space<vmem>>, %arg2: memref<3x128x64xbf16, #tpu.memory_space<vmem>>, %arg3: memref<3x16x8xbf16, #tpu.memory_space<vmem>>, %arg4: memref<128x1xf32, #tpu.memory_space<vmem>>, %arg5: memref<3x128x128xbf16, #tpu.memory_space<vmem>>, %arg6: memref<3x8x4xbf16, #tpu.memory_space<vmem>>, %arg7: memref<128x1xf32, #tpu.memory_space<vmem>>, %arg8: memref<24x128xbf16, #tpu.memory_space<vmem>>, %arg9: memref<24x1xf32, #tpu.memory_space<vmem>>, %arg10: memref<1x24x4xf32, #tpu.memory_space<vmem>>) attributes {dimension_semantics = [#tpu.dimension_semantics<parallel>], iteration_bounds = array<i64: 2>, scalar_prefetch = 0 : i64, scratch_operands = 0 : i64, tpu.core_type = #tpu.core_type<tc>, window_params = [{transform_indices = @transform_0, window_bounds = array<i64: 1, 64, 16>}, {pipeline_mode = #tpu.pipeline_mode<synchronous>, transform_indices = @transform_1, window_bounds = array<i64: 3, 128, 64>}, {pipeline_mode = #tpu.pipeline_mode<synchronous>, transform_indices = @transform_2, window_bounds = array<i64: 3, 16, 8>}, {pipeline_mode = #tpu.pipeline_mode<synchronous>, transform_indices = @transform_3, window_bounds = array<i64: 128, 1>}, {pipeline_mode = #tpu.pipeline_mode<synchronous>, transform_indices = @transform_4, window_bounds = array<i64: 3, 128, 128>}, {pipeline_mode = #tpu.pipeline_mode<synchronous>, transform_indices = @transform_5, window_bounds = array<i64: 3, 8, 4>}, {pipeline_mode = #tpu.pipeline_mode<synchronous>, transform_indices = @transform_6, window_bounds = array<i64: 128, 1>}, {pipeline_mode = #tpu.pipeline_mode<synchronous>, transform_indices = @transform_7, window_bounds = array<i64: 24, 128>}, {pipeline_mode = #tpu.pipeline_mode<synchronous>, transform_indices = @transform_8, window_bounds = array<i64: 24, 1>}, {transform_indices = @transform_9, window_bounds = array<i64: 1, 24, 4>}]} {
    %c0 = arith.constant 0 : index
    %c0_0 = arith.constant 0 : index
    %c0_1 = arith.constant 0 : index
    %0 = vector.load %arg1[%c0, %c0_0, %c0_1] : memref<1x64x16xbf16, #tpu.memory_space<vmem>>, vector<1x64x16xbf16>
    %1 = vector.shape_cast %0 : vector<1x64x16xbf16> to vector<64x16xbf16>
    %c0_2 = arith.constant 0 : index
    %c0_3 = arith.constant 0 : index
    %c0_4 = arith.constant 0 : index
    %2 = vector.load %arg3[%c0_2, %c0_3, %c0_4] : memref<3x16x8xbf16, #tpu.memory_space<vmem>>, vector<1x16x8xbf16>
    %3 = vector.shape_cast %2 : vector<1x16x8xbf16> to vector<16x8xbf16>
    %cst = arith.constant dense<0.000000e+00> : vector<64x8xf32>
    %4 = tpu.matmul %1, %3, %cst {dimension_numbers = #tpu.dot_dimension_numbers<[1], [0], [0], [1], [0, 0, 1, 1], [], []>} : vector<64x16xbf16>, vector<16x8xbf16>, vector<64x8xf32> -> vector<64x8xf32>
    %5 = arith.truncf %4 : vector<64x8xf32> to vector<64x8xbf16>
    %c0_5 = arith.constant 0 : index
    %c0_6 = arith.constant 0 : index
    %c0_7 = arith.constant 0 : index
    %6 = vector.load %arg2[%c0_5, %c0_6, %c0_7] : memref<3x128x64xbf16, #tpu.memory_space<vmem>>, vector<1x128x64xbf16>
    %7 = vector.shape_cast %6 : vector<1x128x64xbf16> to vector<128x64xbf16>
    %cst_8 = arith.constant dense<0.000000e+00> : vector<128x8xf32>
    %8 = tpu.matmul %7, %5, %cst_8 {dimension_numbers = #tpu.dot_dimension_numbers<[1], [0], [0], [1], [0, 0, 1, 1], [], []>} : vector<128x64xbf16>, vector<64x8xbf16>, vector<128x8xf32> -> vector<128x8xf32>
    %c1 = arith.constant 1 : index
    %c0_9 = arith.constant 0 : index
    %c0_10 = arith.constant 0 : index
    %9 = vector.load %arg3[%c1, %c0_9, %c0_10] : memref<3x16x8xbf16, #tpu.memory_space<vmem>>, vector<1x16x8xbf16>
    %10 = vector.shape_cast %9 : vector<1x16x8xbf16> to vector<16x8xbf16>
    %cst_11 = arith.constant dense<0.000000e+00> : vector<64x8xf32>
    %11 = tpu.matmul %1, %10, %cst_11 {dimension_numbers = #tpu.dot_dimension_numbers<[1], [0], [0], [1], [0, 0, 1, 1], [], []>} : vector<64x16xbf16>, vector<16x8xbf16>, vector<64x8xf32> -> vector<64x8xf32>
    %12 = arith.truncf %11 : vector<64x8xf32> to vector<64x8xbf16>
    %c1_12 = arith.constant 1 : index
    %c0_13 = arith.constant 0 : index
    %c0_14 = arith.constant 0 : index
    %13 = vector.load %arg2[%c1_12, %c0_13, %c0_14] : memref<3x128x64xbf16, #tpu.memory_space<vmem>>, vector<1x128x64xbf16>
    %14 = vector.shape_cast %13 : vector<1x128x64xbf16> to vector<128x64xbf16>
    %cst_15 = arith.constant dense<0.000000e+00> : vector<128x8xf32>
    %15 = tpu.matmul %14, %12, %cst_15 {dimension_numbers = #tpu.dot_dimension_numbers<[1], [0], [0], [1], [0, 0, 1, 1], [], []>} : vector<128x64xbf16>, vector<64x8xbf16>, vector<128x8xf32> -> vector<128x8xf32>
    %16 = arith.addf %8, %15 : vector<128x8xf32>
    %c2 = arith.constant 2 : index
    %c0_16 = arith.constant 0 : index
    %c0_17 = arith.constant 0 : index
    %17 = vector.load %arg3[%c2, %c0_16, %c0_17] : memref<3x16x8xbf16, #tpu.memory_space<vmem>>, vector<1x16x8xbf16>
    %18 = vector.shape_cast %17 : vector<1x16x8xbf16> to vector<16x8xbf16>
    %cst_18 = arith.constant dense<0.000000e+00> : vector<64x8xf32>
    %19 = tpu.matmul %1, %18, %cst_18 {dimension_numbers = #tpu.dot_dimension_numbers<[1], [0], [0], [1], [0, 0, 1, 1], [], []>} : vector<64x16xbf16>, vector<16x8xbf16>, vector<64x8xf32> -> vector<64x8xf32>
    %20 = arith.truncf %19 : vector<64x8xf32> to vector<64x8xbf16>
    %c2_19 = arith.constant 2 : index
    %c0_20 = arith.constant 0 : index
    %c0_21 = arith.constant 0 : index
    %21 = vector.load %arg2[%c2_19, %c0_20, %c0_21] : memref<3x128x64xbf16, #tpu.memory_space<vmem>>, vector<1x128x64xbf16>
    %22 = vector.shape_cast %21 : vector<1x128x64xbf16> to vector<128x64xbf16>
    %cst_22 = arith.constant dense<0.000000e+00> : vector<128x8xf32>
    %23 = tpu.matmul %22, %20, %cst_22 {dimension_numbers = #tpu.dot_dimension_numbers<[1], [0], [0], [1], [0, 0, 1, 1], [], []>} : vector<128x64xbf16>, vector<64x8xbf16>, vector<128x8xf32> -> vector<128x8xf32>
    %24 = arith.addf %16, %23 : vector<128x8xf32>
    %c0_23 = arith.constant 0 : index
    %c0_24 = arith.constant 0 : index
    %25 = vector.load %arg4[%c0_23, %c0_24] : memref<128x1xf32, #tpu.memory_space<vmem>>, vector<128x1xf32>
    %26 = vector.broadcast %25 : vector<128x1xf32> to vector<128x8xf32>
    %27 = arith.addf %24, %26 : vector<128x8xf32>
    %cst_25 = arith.constant 0.000000e+00 : f32
    %28 = vector.broadcast %cst_25 : f32 to vector<128x8xf32>
    %29 = arith.subf %28, %27 : vector<128x8xf32>
    %30 = math.exp %29 : vector<128x8xf32>
    %cst_26 = arith.constant 1.000000e+00 : f32
    %31 = vector.broadcast %cst_26 : f32 to vector<128x8xf32>
    %32 = arith.addf %31, %30 : vector<128x8xf32>
    %33 = tpu.reciprocal %32 {approx = true} : vector<128x8xf32> -> vector<128x8xf32>
    %34 = arith.mulf %27, %33 : vector<128x8xf32>
    %35 = arith.truncf %34 : vector<128x8xf32> to vector<128x8xbf16>
    %c0_27 = arith.constant 0 : index
    %c0_28 = arith.constant 0 : index
    %c0_29 = arith.constant 0 : index
    %36 = vector.load %arg6[%c0_27, %c0_28, %c0_29] : memref<3x8x4xbf16, #tpu.memory_space<vmem>>, vector<1x8x4xbf16>
    %37 = vector.shape_cast %36 : vector<1x8x4xbf16> to vector<8x4xbf16>
    %cst_30 = arith.constant dense<0.000000e+00> : vector<128x4xf32>
    %38 = tpu.matmul %35, %37, %cst_30 {dimension_numbers = #tpu.dot_dimension_numbers<[1], [0], [0], [1], [0, 0, 1, 1], [], []>} : vector<128x8xbf16>, vector<8x4xbf16>, vector<128x4xf32> -> vector<128x4xf32>
    %39 = arith.truncf %38 : vector<128x4xf32> to vector<128x4xbf16>
    %c0_31 = arith.constant 0 : index
    %c0_32 = arith.constant 0 : index
    %c0_33 = arith.constant 0 : index
    %40 = vector.load %arg5[%c0_31, %c0_32, %c0_33] : memref<3x128x128xbf16, #tpu.memory_space<vmem>>, vector<1x128x128xbf16>
    %41 = vector.shape_cast %40 : vector<1x128x128xbf16> to vector<128x128xbf16>
    %cst_34 = arith.constant dense<0.000000e+00> : vector<128x4xf32>
    %42 = tpu.matmul %41, %39, %cst_34 {dimension_numbers = #tpu.dot_dimension_numbers<[1], [0], [0], [1], [0, 0, 1, 1], [], []>} : vector<128x128xbf16>, vector<128x4xbf16>, vector<128x4xf32> -> vector<128x4xf32>
    %c1_35 = arith.constant 1 : index
    %c0_36 = arith.constant 0 : index
    %c0_37 = arith.constant 0 : index
    %43 = vector.load %arg6[%c1_35, %c0_36, %c0_37] : memref<3x8x4xbf16, #tpu.memory_space<vmem>>, vector<1x8x4xbf16>
    %44 = vector.shape_cast %43 : vector<1x8x4xbf16> to vector<8x4xbf16>
    %cst_38 = arith.constant dense<0.000000e+00> : vector<128x4xf32>
    %45 = tpu.matmul %35, %44, %cst_38 {dimension_numbers = #tpu.dot_dimension_numbers<[1], [0], [0], [1], [0, 0, 1, 1], [], []>} : vector<128x8xbf16>, vector<8x4xbf16>, vector<128x4xf32> -> vector<128x4xf32>
    %46 = arith.truncf %45 : vector<128x4xf32> to vector<128x4xbf16>
    %c1_39 = arith.constant 1 : index
    %c0_40 = arith.constant 0 : index
    %c0_41 = arith.constant 0 : index
    %47 = vector.load %arg5[%c1_39, %c0_40, %c0_41] : memref<3x128x128xbf16, #tpu.memory_space<vmem>>, vector<1x128x128xbf16>
    %48 = vector.shape_cast %47 : vector<1x128x128xbf16> to vector<128x128xbf16>
    %cst_42 = arith.constant dense<0.000000e+00> : vector<128x4xf32>
    %49 = tpu.matmul %48, %46, %cst_42 {dimension_numbers = #tpu.dot_dimension_numbers<[1], [0], [0], [1], [0, 0, 1, 1], [], []>} : vector<128x128xbf16>, vector<128x4xbf16>, vector<128x4xf32> -> vector<128x4xf32>
    %50 = arith.addf %42, %49 : vector<128x4xf32>
    %c2_43 = arith.constant 2 : index
    %c0_44 = arith.constant 0 : index
    %c0_45 = arith.constant 0 : index
    %51 = vector.load %arg6[%c2_43, %c0_44, %c0_45] : memref<3x8x4xbf16, #tpu.memory_space<vmem>>, vector<1x8x4xbf16>
    %52 = vector.shape_cast %51 : vector<1x8x4xbf16> to vector<8x4xbf16>
    %cst_46 = arith.constant dense<0.000000e+00> : vector<128x4xf32>
    %53 = tpu.matmul %35, %52, %cst_46 {dimension_numbers = #tpu.dot_dimension_numbers<[1], [0], [0], [1], [0, 0, 1, 1], [], []>} : vector<128x8xbf16>, vector<8x4xbf16>, vector<128x4xf32> -> vector<128x4xf32>
    %54 = arith.truncf %53 : vector<128x4xf32> to vector<128x4xbf16>
    %c2_47 = arith.constant 2 : index
    %c0_48 = arith.constant 0 : index
    %c0_49 = arith.constant 0 : index
    %55 = vector.load %arg5[%c2_47, %c0_48, %c0_49] : memref<3x128x128xbf16, #tpu.memory_space<vmem>>, vector<1x128x128xbf16>
    %56 = vector.shape_cast %55 : vector<1x128x128xbf16> to vector<128x128xbf16>
    %cst_50 = arith.constant dense<0.000000e+00> : vector<128x4xf32>
    %57 = tpu.matmul %56, %54, %cst_50 {dimension_numbers = #tpu.dot_dimension_numbers<[1], [0], [0], [1], [0, 0, 1, 1], [], []>} : vector<128x128xbf16>, vector<128x4xbf16>, vector<128x4xf32> -> vector<128x4xf32>
    %58 = arith.addf %50, %57 : vector<128x4xf32>
    %c0_51 = arith.constant 0 : index
    %c0_52 = arith.constant 0 : index
    %59 = vector.load %arg7[%c0_51, %c0_52] : memref<128x1xf32, #tpu.memory_space<vmem>>, vector<128x1xf32>
    %60 = vector.broadcast %59 : vector<128x1xf32> to vector<128x4xf32>
    %61 = arith.addf %58, %60 : vector<128x4xf32>
    %cst_53 = arith.constant 0.000000e+00 : f32
    %62 = vector.broadcast %cst_53 : f32 to vector<128x4xf32>
    %63 = arith.subf %62, %61 : vector<128x4xf32>
    %64 = math.exp %63 : vector<128x4xf32>
    %cst_54 = arith.constant 1.000000e+00 : f32
    %65 = vector.broadcast %cst_54 : f32 to vector<128x4xf32>
    %66 = arith.addf %65, %64 : vector<128x4xf32>
    %67 = tpu.reciprocal %66 {approx = true} : vector<128x4xf32> -> vector<128x4xf32>
    %68 = arith.mulf %61, %67 : vector<128x4xf32>
    %69 = arith.truncf %68 : vector<128x4xf32> to vector<128x4xbf16>
    %c0_55 = arith.constant 0 : index
    %c0_56 = arith.constant 0 : index
    %70 = vector.load %arg8[%c0_55, %c0_56] : memref<24x128xbf16, #tpu.memory_space<vmem>>, vector<24x128xbf16>
    %cst_57 = arith.constant dense<0.000000e+00> : vector<24x4xf32>
    %71 = tpu.matmul %70, %69, %cst_57 {dimension_numbers = #tpu.dot_dimension_numbers<[1], [0], [0], [1], [0, 0, 1, 1], [], []>} : vector<24x128xbf16>, vector<128x4xbf16>, vector<24x4xf32> -> vector<24x4xf32>
    %c0_58 = arith.constant 0 : index
    %c0_59 = arith.constant 0 : index
    %72 = vector.load %arg9[%c0_58, %c0_59] : memref<24x1xf32, #tpu.memory_space<vmem>>, vector<24x1xf32>
    %73 = vector.broadcast %72 : vector<24x1xf32> to vector<24x4xf32>
    %74 = arith.addf %71, %73 : vector<24x4xf32>
    %c0_60 = arith.constant 0 : index
    %c0_61 = arith.constant 0 : index
    %c0_62 = arith.constant 0 : index
    %75 = vector.load %arg10[%c0_60, %c0_61, %c0_62] : memref<1x24x4xf32, #tpu.memory_space<vmem>>, vector<1x24x4xf32>
    %76 = vector.shape_cast %75 : vector<1x24x4xf32> to vector<24x4xf32>
    %77 = vector.shape_cast %74 : vector<24x4xf32> to vector<1x24x4xf32>
    tpu.vector_store %arg10[%c0_60, %c0_61, %c0_62], %77 {strides = array<i32>} : memref<1x24x4xf32, #tpu.memory_space<vmem>>, vector<1x24x4xf32>,
    return
  }
  func.func @transform_0(%arg0: i32) -> (i32, i32, i32) {
    %c0_i32 = arith.constant 0 : i32
    %c0_i32_0 = arith.constant 0 : i32
    %c0_i32_1 = arith.constant 0 : i32
    return %arg0, %c0_i32, %c0_i32_0 : i32, i32, i32
  }
  func.func @transform_1(%arg0: i32) -> (i32, i32, i32) {
    %c0_i32 = arith.constant 0 : i32
    %c0_i32_0 = arith.constant 0 : i32
    %c0_i32_1 = arith.constant 0 : i32
    %c0_i32_2 = arith.constant 0 : i32
    return %c0_i32, %c0_i32_0, %c0_i32_1 : i32, i32, i32
  }
  func.func @transform_2(%arg0: i32) -> (i32, i32, i32) {
    %c0_i32 = arith.constant 0 : i32
    %c0_i32_0 = arith.constant 0 : i32
    %c0_i32_1 = arith.constant 0 : i32
    %c0_i32_2 = arith.constant 0 : i32
    return %c0_i32, %c0_i32_0, %c0_i32_1 : i32, i32, i32
  }
  func.func @transform_3(%arg0: i32) -> (i32, i32) {
    %c0_i32 = arith.constant 0 : i32
    %c0_i32_0 = arith.constant 0 : i32
    %c0_i32_1 = arith.constant 0 : i32
    return %c0_i32, %c0_i32_0 : i32, i32
  }
  func.func @transform_4(%arg0: i32) -> (i32, i32, i32) {
    %c0_i32 = arith.constant 0 : i32
    %c0_i32_0 = arith.constant 0 : i32
    %c0_i32_1 = arith.constant 0 : i32
    %c0_i32_2 = arith.constant 0 : i32
    return %c0_i32, %c0_i32_0, %c0_i32_1 : i32, i32, i32
  }
  func.func @transform_5(%arg0: i32) -> (i32, i32, i32) {
    %c0_i32 = arith.constant 0 : i32
    %c0_i32_0 = arith.constant 0 : i32
    %c0_i32_1 = arith.constant 0 : i32
    %c0_i32_2 = arith.constant 0 : i32
    return %c0_i32, %c0_i32_0, %c0_i32_1 : i32, i32, i32
  }
  func.func @transform_6(%arg0: i32) -> (i32, i32) {
    %c0_i32 = arith.constant 0 : i32
    %c0_i32_0 = arith.constant 0 : i32
    %c0_i32_1 = arith.constant 0 : i32
    return %c0_i32, %c0_i32_0 : i32, i32
  }
  func.func @transform_7(%arg0: i32) -> (i32, i32) {
    %c0_i32 = arith.constant 0 : i32
    %c0_i32_0 = arith.constant 0 : i32
    %c0_i32_1 = arith.constant 0 : i32
    return %c0_i32, %c0_i32_0 : i32, i32
  }
  func.func @transform_8(%arg0: i32) -> (i32, i32) {
    %c0_i32 = arith.constant 0 : i32
    %c0_i32_0 = arith.constant 0 : i32
    %c0_i32_1 = arith.constant 0 : i32
    return %c0_i32, %c0_i32_0 : i32, i32
  }
  func.func @transform_9(%arg0: i32) -> (i32, i32, i32) {
    %c0_i32 = arith.constant 0 : i32
    %c0_i32_0 = arith.constant 0 : i32
    %c0_i32_1 = arith.constant 0 : i32
    return %arg0, %c0_i32, %c0_i32_0 : i32, i32, i32
  }
}

</mosaic_0001>

<llo_original>
// kernel: tpu_custom_call.1
$region0: #{tpu_custom_call.1}
  #allocation0 [shape = 'u32[]', space=smem, size = 0x4, offset = 0x4, fixed_abs, tag = 'smem constant byte address 0x4 - core index']
  #allocation1 [shape = 'u32[144,128]{1,0:T(1,128)}', space=vmem, size = 0x12000, scoped, tag = 'internal scratch']
  %s0 = inlined_call_operand.vmem [shape: bf16[2,64,16], index: 0, kind: input, shape index: {}]
  %s1 = inlined_call_operand.vmem [shape: bf16[3,128,64], index: 1, kind: input, shape index: {}]
  %s2 = inlined_call_operand.vmem [shape: bf16[3,16,8], index: 2, kind: input, shape index: {}]
  %s3 = inlined_call_operand.vmem [shape: f32[128,1], index: 3, kind: input, shape index: {}]
  %s4 = inlined_call_operand.vmem [shape: bf16[3,128,128], index: 4, kind: input, shape index: {}]
  %s5 = inlined_call_operand.vmem [shape: bf16[3,8,4], index: 5, kind: input, shape index: {}]
  %s6 = inlined_call_operand.vmem [shape: f32[128,1], index: 6, kind: input, shape index: {}]
  %s7 = inlined_call_operand.vmem [shape: bf16[24,128], index: 7, kind: input, shape index: {}]
  %s8 = inlined_call_operand.vmem [shape: f32[24,1], index: 8, kind: input, shape index: {}]
  %s9 = inlined_call_operand.vmem [shape: f32[2,24,4], index: 9, kind: output, shape index: {}]
  %s10 = sld [smem:[#allocation0]]
  $region69: #{tpu_custom_call.1} parent=0
    _
  %s12 = ssub.s32 1, %s10
  %s13 = scalar_select 0, %s12, %s10
  loop: start=0, step=1, limit=4
  $region2: #{tpu_custom_call.1} parent=0 // loop_pre_header
    _
  $region3: #{tpu_custom_call.1} parent=0 // loop_header
    %s15 = sphi 0, %s19
    %p16 = scmp.ge.s32.totalorder %s15, 4
    %s25 = sphi 0, %s27
    %s28 = sphi 0, %s25
    %s29 = sphi 0, %s28
    %s45 = sphi 0, %s29
    %s49 = sphi 0, %s49
    %s51 = sphi 0, %s49
    %s52 = sphi 0, %s51
    %s66 = sphi 0, %s52
    %s70 = sphi 0, %s70
    %s72 = sphi 0, %s70
    %s73 = sphi 0, %s72
    %s87 = sphi 0, %s73
    %s91 = sphi 0, %s91
    %s93 = sphi 0, %s91
    %s94 = sphi 0, %s93
    %s108 = sphi 0, %s94
    %s112 = sphi 0, %s112
    %s114 = sphi 0, %s112
    %s115 = sphi 0, %s114
    %s129 = sphi 0, %s115
    %s133 = sphi 0, %s133
    %s135 = sphi 0, %s133
    %s136 = sphi 0, %s135
    %s150 = sphi 0, %s136
    %s154 = sphi 0, %s154
    %s156 = sphi 0, %s154
    %s157 = sphi 0, %s156
    %s171 = sphi 0, %s157
    %s175 = sphi 0, %s175
    %s177 = sphi 0, %s175
    %s178 = sphi 0, %s177
    %s192 = sphi 0, %s178
    %s196 = sphi 0, %s196
    %s198 = sphi 0, %s196
    %s199 = sphi 0, %s198
    %s213 = sphi 0, %s199
    %s219 = sphi 0, %s221
    %s222 = sphi 0, %s219
    %s223 = sphi 0, %s222
    %s239 = sphi 0, %s223
  $region4: #{tpu_custom_call.1} parent=0 // loop_header_branch
    %18 = sbr.rel (%p16) target = $region8
  $region5: #{tpu_custom_call.1} parent=0 // loop_body
    %s20 = ssub.s32 %s15, 1
    %s21 = ssub.s32 %s15, 2
    %s22 = sadd.s32 %s15, 1
    %s23 = ssub.s32 %s15, %s22
    %p24 = scmp.eq.s32.totalorder %s23, 0
    %s26 = sadd.s32 %s25, 1
    %s27 = scalar_select %p24, %s25, %s26
    %p30 = pneg %p24
    %p31 = scmp.eq.s32.totalorder %s15, 1
    %p32 = por %p30, %p31
    %p33 = scmp.ne.s32.totalorder %s25, %s28
    %p34 = scmp.eq.s32.totalorder %s15, 0
    %p35 = por %p33, %p34
    %p36 = scmp.ne.s32.totalorder %s25, %s28
    %p37 = scmp.eq.s32.totalorder %s20, 1
    %p38 = por %p36, %p37
    %p39 = scmp.ne.s32.totalorder %s28, %s29
    %p40 = scmp.eq.s32.totalorder %s20, 0
    %p41 = por %p39, %p40
    %p42 = scmp.ne.s32.totalorder %s28, %s29
    %p43 = scmp.eq.s32.totalorder %s21, 1
    %p44 = por %p42, %p43
    %p46 = scmp.ne.s32.totalorder %s29, %s45
    %p47 = scmp.eq.s32.totalorder %s21, 0
    %p48 = por %p46, %p47
    %s50 = sadd.s32 %s49, 1
    %p53 = scmp.eq.s32.totalorder %s15, 1
    %p54 = scmp.ne.s32.totalorder %s49, %s51
    %p55 = scmp.eq.s32.totalorder %s15, 0
    %p56 = por %p54, %p55
    %p57 = scmp.ne.s32.totalorder %s49, %s51
    %p58 = scmp.eq.s32.totalorder %s20, 1
    %p59 = por %p57, %p58
    %p60 = scmp.ne.s32.totalorder %s51, %s52
    %p61 = scmp.eq.s32.totalorder %s20, 0
    %p62 = por %p60, %p61
    %p63 = scmp.ne.s32.totalorder %s51, %s52
    %p64 = scmp.eq.s32.totalorder %s21, 1
    %p65 = por %p63, %p64
    %p67 = scmp.ne.s32.totalorder %s52, %s66
    %p68 = scmp.eq.s32.totalorder %s21, 0
    %p69 = por %p67, %p68
    %s71 = sadd.s32 %s70, 1
    %p74 = scmp.eq.s32.totalorder %s15, 1
    %p75 = scmp.ne.s32.totalorder %s70, %s72
    %p76 = scmp.eq.s32.totalorder %s15, 0
    %p77 = por %p75, %p76
    %p78 = scmp.ne.s32.totalorder %s70, %s72
    %p79 = scmp.eq.s32.totalorder %s20, 1
    %p80 = por %p78, %p79
    %p81 = scmp.ne.s32.totalorder %s72, %s73
    %p82 = scmp.eq.s32.totalorder %s20, 0
    %p83 = por %p81, %p82
    %p84 = scmp.ne.s32.totalorder %s72, %s73
    %p85 = scmp.eq.s32.totalorder %s21, 1
    %p86 = por %p84, %p85
    %p88 = scmp.ne.s32.totalorder %s73, %s87
    %p89 = scmp.eq.s32.totalorder %s21, 0
    %p90 = por %p88, %p89
    %s92 = sadd.s32 %s91, 1
    %p95 = scmp.eq.s32.totalorder %s15, 1
    %p96 = scmp.ne.s32.totalorder %s91, %s93
    %p97 = scmp.eq.s32.totalorder %s15, 0
    %p98 = por %p96, %p97
    %p99 = scmp.ne.s32.totalorder %s91, %s93
    %p100 = scmp.eq.s32.totalorder %s20, 1
    %p101 = por %p99, %p100
    %p102 = scmp.ne.s32.totalorder %s93, %s94
    %p103 = scmp.eq.s32.totalorder %s20, 0
    %p104 = por %p102, %p103
    %p105 = scmp.ne.s32.totalorder %s93, %s94
    %p106 = scmp.eq.s32.totalorder %s21, 1
    %p107 = por %p105, %p106
    %p109 = scmp.ne.s32.totalorder %s94, %s108
    %p110 = scmp.eq.s32.totalorder %s21, 0
    %p111 = por %p109, %p110
    %s113 = sadd.s32 %s112, 1
    %p116 = scmp.eq.s32.totalorder %s15, 1
    %p117 = scmp.ne.s32.totalorder %s112, %s114
    %p118 = scmp.eq.s32.totalorder %s15, 0
    %p119 = por %p117, %p118
    %p120 = scmp.ne.s32.totalorder %s112, %s114
    %p121 = scmp.eq.s32.totalorder %s20, 1
    %p122 = por %p120, %p121
    %p123 = scmp.ne.s32.totalorder %s114, %s115
    %p124 = scmp.eq.s32.totalorder %s20, 0
    %p125 = por %p123, %p124
    %p126 = scmp.ne.s32.totalorder %s114, %s115
    %p127 = scmp.eq.s32.totalorder %s21, 1
    %p128 = por %p126, %p127
    %p130 = scmp.ne.s32.totalorder %s115, %s129
    %p131 = scmp.eq.s32.totalorder %s21, 0
    %p132 = por %p130, %p131
    %s134 = sadd.s32 %s133, 1
    %p137 = scmp.eq.s32.totalorder %s15, 1
    %p138 = scmp.ne.s32.totalorder %s133, %s135
    %p139 = scmp.eq.s32.totalorder %s15, 0
    %p140 = por %p138, %p139
    %p141 = scmp.ne.s32.totalorder %s133, %s135
    %p142 = scmp.eq.s32.totalorder %s20, 1
    %p143 = por %p141, %p142
    %p144 = scmp.ne.s32.totalorder %s135, %s136
    %p145 = scmp.eq.s32.totalorder %s20, 0
    %p146 = por %p144, %p145
    %p147 = scmp.ne.s32.totalorder %s135, %s136
    %p148 = scmp.eq.s32.totalorder %s21, 1
    %p149 = por %p147, %p148
    %p151 = scmp.ne.s32.totalorder %s136, %s150
    %p152 = scmp.eq.s32.totalorder %s21, 0
    %p153 = por %p151, %p152
    %s155 = sadd.s32 %s154, 1
    %p158 = scmp.eq.s32.totalorder %s15, 1
    %p159 = scmp.ne.s32.totalorder %s154, %s156
    %p160 = scmp.eq.s32.totalorder %s15, 0
    %p161 = por %p159, %p160
    %p162 = scmp.ne.s32.totalorder %s154, %s156
    %p163 = scmp.eq.s32.totalorder %s20, 1
    %p164 = por %p162, %p163
    %p165 = scmp.ne.s32.totalorder %s156, %s157
    %p166 = scmp.eq.s32.totalorder %s20, 0
    %p167 = por %p165, %p166
    %p168 = scmp.ne.s32.totalorder %s156, %s157
    %p169 = scmp.eq.s32.totalorder %s21, 1
    %p170 = por %p168, %p169
    %p172 = scmp.ne.s32.totalorder %s157, %s171
    %p173 = scmp.eq.s32.totalorder %s21, 0
    %p174 = por %p172, %p173
    %s176 = sadd.s32 %s175, 1
    %p179 = scmp.eq.s32.totalorder %s15, 1
    %p180 = scmp.ne.s32.totalorder %s175, %s177
    %p181 = scmp.eq.s32.totalorder %s15, 0
    %p182 = por %p180, %p181
    %p183 = scmp.ne.s32.totalorder %s175, %s177
    %p184 = scmp.eq.s32.totalorder %s20, 1
    %p185 = por %p183, %p184
    %p186 = scmp.ne.s32.totalorder %s177, %s178
    %p187 = scmp.eq.s32.totalorder %s20, 0
    %p188 = por %p186, %p187
    %p189 = scmp.ne.s32.totalorder %s177, %s178
    %p190 = scmp.eq.s32.totalorder %s21, 1
    %p191 = por %p189, %p190
    %p193 = scmp.ne.s32.totalorder %s178, %s192
    %p194 = scmp.eq.s32.totalorder %s21, 0
    %p195 = por %p193, %p194
    %s197 = sadd.s32 %s196, 1
    %p200 = scmp.eq.s32.totalorder %s15, 1
    %p201 = scmp.ne.s32.totalorder %s196, %s198
    %p202 = scmp.eq.s32.totalorder %s15, 0
    %p203 = por %p201, %p202
    %p204 = scmp.ne.s32.totalorder %s196, %s198
    %p205 = scmp.eq.s32.totalorder %s20, 1
    %p206 = por %p204, %p205
    %p207 = scmp.ne.s32.totalorder %s198, %s199
    %p208 = scmp.eq.s32.totalorder %s20, 0
    %p209 = por %p207, %p208
    %p210 = scmp.ne.s32.totalorder %s198, %s199
    %p211 = scmp.eq.s32.totalorder %s21, 1
    %p212 = por %p210, %p211
    %p214 = scmp.ne.s32.totalorder %s199, %s213
    %p215 = scmp.eq.s32.totalorder %s21, 0
    %p216 = por %p214, %p215
    %s217 = ssub.s32 %s15, %s22
    %p218 = scmp.eq.s32.totalorder %s217, 0
    %s220 = sadd.s32 %s219, 1
    %s221 = scalar_select %p218, %s219, %s220
    %p224 = pneg %p218
    %p225 = scmp.eq.s32.totalorder %s15, 1
    %p226 = por %p224, %p225
    %p227 = scmp.ne.s32.totalorder %s219, %s222
    %p228 = scmp.eq.s32.totalorder %s15, 0
    %p229 = por %p227, %p228
    %p230 = scmp.ne.s32.totalorder %s219, %s222
    %p231 = scmp.eq.s32.totalorder %s20, 1
    %p232 = por %p230, %p231
    %p233 = scmp.ne.s32.totalorder %s222, %s223
    %p234 = scmp.eq.s32.totalorder %s20, 0
    %p235 = por %p233, %p234
    %p236 = scmp.ne.s32.totalorder %s222, %s223
    %p237 = scmp.eq.s32.totalorder %s21, 1
    %p238 = por %p236, %p237
    %p240 = scmp.ne.s32.totalorder %s223, %s239
    %p241 = scmp.eq.s32.totalorder %s21, 0
    %p242 = por %p240, %p241
    %p243 = scmp.le.s32.totalorder 1, %s15
    %p244 = scmp.lt.s32.totalorder %s15, 3
    %p245 = pnand %p243, %p244
    %p246 = pneg %p245
    // Predicated region
    $region9: #{tpu_custom_call.1} parent=5 // pred_check
      _
    $region10: #{tpu_custom_call.1} parent=5 // pred_check_branch
      %248 = sbr.rel (%p245) target = $region12
    $region11: #{tpu_custom_call.1} parent=5 // pred_region
      %s249 = ssub.s32 %s15, 1
      // Predicated region
      $region13: #{tpu_custom_call.1} parent=11 // pred_check
        %p250 = pneg %p62
      $region14: #{tpu_custom_call.1} parent=11 // pred_check_branch
        %252 = sbr.rel (%p250) target = $region16
      $region15: #{tpu_custom_call.1} parent=11 // pred_region
        _
      $region16: #{tpu_custom_call.1} parent=11 // pred_fallthru
        _
      // Predicated region
      $region17: #{tpu_custom_call.1} parent=11 // pred_check
        %p253 = pneg %p83
      $region18: #{tpu_custom_call.1} parent=11 // pred_check_branch
        %255 = sbr.rel (%p253) target = $region20
      $region19: #{tpu_custom_call.1} parent=11 // pred_region
        _
      $region20: #{tpu_custom_call.1} parent=11 // pred_fallthru
        _
      // Predicated region
      $region21: #{tpu_custom_call.1} parent=11 // pred_check
        %p256 = pneg %p104
      $region22: #{tpu_custom_call.1} parent=11 // pred_check_branch
        %258 = sbr.rel (%p256) target = $region24
      $region23: #{tpu_custom_call.1} parent=11 // pred_region
        _
      $region24: #{tpu_custom_call.1} parent=11 // pred_fallthru
        _
      // Predicated region
      $region25: #{tpu_custom_call.1} parent=11 // pred_check
        %p259 = pneg %p125
      $region26: #{tpu_custom_call.1} parent=11 // pred_check_branch
        %261 = sbr.rel (%p259) target = $region28
      $region27: #{tpu_custom_call.1} parent=11 // pred_region
        _
      $region28: #{tpu_custom_call.1} parent=11 // pred_fallthru
        _
      // Predicated region
      $region29: #{tpu_custom_call.1} parent=11 // pred_check
        %p262 = pneg %p146
      $region30: #{tpu_custom_call.1} parent=11 // pred_check_branch
        %264 = sbr.rel (%p262) target = $region32
      $region31: #{tpu_custom_call.1} parent=11 // pred_region
        _
      $region32: #{tpu_custom_call.1} parent=11 // pred_fallthru
        _
      // Predicated region
      $region33: #{tpu_custom_call.1} parent=11 // pred_check
        %p265 = pneg %p167
      $region34: #{tpu_custom_call.1} parent=11 // pred_check_branch
        %267 = sbr.rel (%p265) target = $region36
      $region35: #{tpu_custom_call.1} parent=11 // pred_region
        _
      $region36: #{tpu_custom_call.1} parent=11 // pred_fallthru
        _
      // Predicated region
      $region37: #{tpu_custom_call.1} parent=11 // pred_check
        %p268 = pneg %p188
      $region38: #{tpu_custom_call.1} parent=11 // pred_check_branch
        %270 = sbr.rel (%p268) target = $region40
      $region39: #{tpu_custom_call.1} parent=11 // pred_region
        _
      $region40: #{tpu_custom_call.1} parent=11 // pred_fallthru
        _
      // Predicated region
      $region41: #{tpu_custom_call.1} parent=11 // pred_check
        %p271 = pneg %p209
      $region42: #{tpu_custom_call.1} parent=11 // pred_check_branch
        %273 = sbr.rel (%p271) target = $region44
      $region43: #{tpu_custom_call.1} parent=11 // pred_region
        _
      $region44: #{tpu_custom_call.1} parent=11 // pred_fallthru
        _
    $region12: #{tpu_custom_call.1} parent=5 // pred_fallthru
      _
    %p274 = scmp.lt.s32.totalorder %s15, 2
    // Predicated region
    $region45: #{tpu_custom_call.1} parent=5 // pred_check
      %p275 = pneg %p274
    $region46: #{tpu_custom_call.1} parent=5 // pred_check_branch
      %277 = sbr.rel (%p275) target = $region48
    $region47: #{tpu_custom_call.1} parent=5 // pred_region
      // Predicated region
      $region49: #{tpu_custom_call.1} parent=47 // pred_check
        %p278 = pneg %p35
      $region50: #{tpu_custom_call.1} parent=47 // pred_check_branch
        %280 = sbr.rel (%p278) target = $region52
      $region51: #{tpu_custom_call.1} parent=47 // pred_region
        %p281 = scmp.lt.s32.totalorder %s15, 1
        %s282 = scalar_select %p281, %s15, 1
        %s283 = smul.addr %s282, 8
        %s284 = smul.addr %s283, 4
        %s285 = scalar_lea.vmem %s0, %s284
      $region52: #{tpu_custom_call.1} parent=47 // pred_fallthru
        _
    $region48: #{tpu_custom_call.1} parent=5 // pred_fallthru
      _
    %p286 = scmp.le.s32.totalorder 1, %s15
    %p287 = scmp.lt.s32.totalorder %s15, 3
    %p288 = pnand %p286, %p287
    %p289 = pneg %p288
    // Predicated region
    $region53: #{tpu_custom_call.1} parent=5 // pred_check
      _
    $region54: #{tpu_custom_call.1} parent=5 // pred_check_branch
      %291 = sbr.rel (%p288) target = $region56
    $region55: #{tpu_custom_call.1} parent=5 // pred_region
      %s292 = ssub.s32 %s15, 1
      %p293 = scmp.lt.s32.totalorder %s20, 1
      %s294 = scalar_select %p293, %s20, 1
      %s295 = smul.addr %s294, 8
      %s296 = smul.addr %s295, 4
      %s297 = scalar_lea.vmem %s0, %s296
      %p298 = pneg %p41
      %p299 = pneg %p38
      %p300 = pneg %p62
      %p301 = pneg %p59
      %p302 = pneg %p83
      %p303 = pneg %p80
      %p304 = pneg %p104
      %p305 = pneg %p101
      %p306 = pneg %p125
      %p307 = pneg %p122
      %p308 = pneg %p146
      %p309 = pneg %p143
      %p310 = pneg %p167
      %p311 = pneg %p164
      %p312 = pneg %p188
      %p313 = pneg %p185
      %p314 = pneg %p209
      %p315 = pneg %p206
      %p316 = pneg %p235
      %p317 = pneg %p232
      %p318 = scmp.lt.s32.totalorder %s20, 1
      %s319 = scalar_select %p318, %s20, 1
      %s320 = smul.addr %s319, 3
      %s321 = smul.addr %s320, 8
      %s322 = scalar_lea.vmem %s9, %s321
      %p323 = scmp.lt.s32.totalorder %s20, 1
      %s324 = scalar_select %p323, %s20, 1
      %s325 = smul.addr %s324, 8
      %s326 = smul.addr %s325, 4
      %s327 = scalar_lea.vmem %s0, %s326
      %p328 = scmp.lt.s32.totalorder %s20, 1
      %s329 = scalar_select %p328, %s20, 1
      %s330 = smul.addr %s329, 3
      %s331 = smul.addr %s330, 8
      %s332 = scalar_lea.vmem %s9, %s331
      %v334 = vld [vmem:[%s327] sm:$0xf]
      %v335 = vld [vmem:[%s327 + $0x4] sm:$0xf]
      %v336 = vld [vmem:[%s327 + $0x8] sm:$0xf]
      %v337 = vld [vmem:[%s327 + $0xc] sm:$0xf]
      %v338 = vld [vmem:[%s327 + $0x10] sm:$0xf]
      %v339 = vld [vmem:[%s327 + $0x14] sm:$0xf]
      %v340 = vld [vmem:[%s327 + $0x18] sm:$0xf]
      %v341 = vld [vmem:[%s327 + $0x1c] sm:$0xf]
      %v342 = vld [vmem:[%s2] sm:$0xf]
      %v343 = vld [vmem:[%s2 + $0x4] sm:$0xf]
      %v352 = vunpack.c.l.b16 %v334
      %v353 = vunpack.c.l.b16 %v335
      %v354 = vunpack.c.l.b16 %v336
      %v355 = vunpack.c.l.b16 %v337
      %v356 = vunpack.c.l.b16 %v338
      %v357 = vunpack.c.l.b16 %v339
      %v358 = vunpack.c.l.b16 %v340
      %v359 = vunpack.c.l.b16 %v341
      %v360 = vpack.c.b16 %v353, %v352
      %v361 = vpack.c.b16 %v355, %v354
      %v362 = vpack.c.b16 %v357, %v356
      %v363 = vpack.c.b16 %v359, %v358
      %v366 = vunpack.c.l.b16 %v342
      %v367 = vunpack.c.l.b16 %v343
      %v368 = vpack.c.b16 %v367, %v366
      %vm370 = vcmask 130048
      %v372 = vsel %vm370, %v360, 0
      %v375 = vsel %vm370, %v361, 0
      %v378 = vsel %vm370, %v362, 0
      %v381 = vsel %vm370, %v363, 0
      %383 = vmatprep.subr.bf16.mxu0 0
      %384 = vmatpush1.bf16.msra.mxu0 0
      %385 = vmatprep.subr.bf16.mxu0 0
      %386 = vmatpush1.bf16.msra.mxu0 0
      %387 = vmatprep.subr.bf16.mxu0 0
      %388 = vmatpush1.bf16.msra.mxu0 0
      %389 = vmatprep.subr.bf16.mxu0 0
      %390 = vmatpush1.bf16.msra.mxu0 0
      %391 = vmatprep.subr.bf16.mxu0 0
      %392 = vmatpush1.bf16.msra.mxu0 0
      %393 = vmatprep.subr.bf16.mxu0 0
      %394 = vmatpush1.bf16.msra.mxu0 0
      %395 = vmatprep.subr.bf16.mxu0 0
      %396 = vmatpush1.bf16.msra.mxu0 0
      %397 = vmatprep.subr.bf16.mxu0 0
      %398 = vmatpush1.bf16.msra.mxu0 %v368
      %399 = vmatprep.subr.bf16.mxu0 0
      %400 = vmatpush2.bf16.msra.mxu0 0
      %401 = vmatprep.subr.bf16.mxu0 0
      %402 = vmatpush2.bf16.msra.mxu0 0
      %403 = vmatprep.subr.bf16.mxu0 0
      %404 = vmatpush2.bf16.msra.mxu0 0
      %405 = vmatprep.subr.bf16.mxu0 0
      %406 = vmatpush2.bf16.msra.mxu0 0
      %407 = vmatprep.subr.bf16.mxu0 0
      %408 = vmatpush2.bf16.msra.mxu0 0
      %409 = vmatprep.subr.bf16.mxu0 0
      %410 = vmatpush2.bf16.msra.mxu0 0
      %411 = vmatprep.subr.bf16.mxu0 0
      %412 = vmatpush2.bf16.msra.mxu0 0
      %413 = vmatprep.subr.bf16.mxu0 0
      %414 = vmatpush2.bf16.msra.mxu0 0
      %415 = vmatprep.mubr.bf16.mxu0 0
      %416 = vmatmul.mubr.bf16.gmra.mxu0 %v372
      %v417 = vpop.f32.mrf.mxu0
      %v418 = vadd.f32 0.0, %v417
      %v419 = vpop.f32.mrf.mxu0
      %v420 = vpop.f32.mrf.mxu0
      %v421 = vadd.f32 0.0, %v420
      %v422 = vpop.f32.mrf.mxu0
      %423 = vmatprep.mubr.bf16.mxu0 0
      %424 = vmatmul.mubr.bf16.gmra.mxu0 %v375
      %v425 = vpop.f32.mrf.mxu0
      %v426 = vadd.f32 0.0, %v425
      %v427 = vpop.f32.mrf.mxu0
      %v428 = vpop.f32.mrf.mxu0
      %v429 = vadd.f32 0.0, %v428
      %v430 = vpop.f32.mrf.mxu0
      %431 = vmatprep.mubr.bf16.mxu0 0
      %432 = vmatmul.mubr.bf16.gmra.mxu0 %v378
      %v433 = vpop.f32.mrf.mxu0
      %v434 = vadd.f32 0.0, %v433
      %v435 = vpop.f32.mrf.mxu0
      %v436 = vpop.f32.mrf.mxu0
      %v437 = vadd.f32 0.0, %v436
      %v438 = vpop.f32.mrf.mxu0
      %439 = vmatprep.mubr.bf16.mxu0 0
      %440 = vmatmul.mubr.bf16.gmra.mxu0 %v381
      %v441 = vpop.f32.mrf.mxu0
      %v442 = vadd.f32 0.0, %v441
      %v443 = vpop.f32.mrf.mxu0
      %v444 = vpop.f32.mrf.mxu0
      %v445 = vadd.f32 0.0, %v444
      %v446 = vpop.f32.mrf.mxu0
      %447 = vdwg.mxu0
      %v448 = vpack.c.bf16 %v421, %v418
      %v449 = vpack.c.bf16 %v429, %v426
      %v450 = vpack.c.bf16 %v437, %v434
      %v451 = vpack.c.bf16 %v445, %v442
      %v452 = vld [vmem:[%s1] sm:$0xf]
      %v453 = vld [vmem:[%s1 + $0x4] sm:$0xf]
      %v454 = vld [vmem:[%s1 + $0x8] sm:$0xf]
      %v455 = vld [vmem:[%s1 + $0xc] sm:$0xf]
      %v456 = vld [vmem:[%s1 + $0x10] sm:$0xf]
      %v457 = vld [vmem:[%s1 + $0x14] sm:$0xf]
      %v458 = vld [vmem:[%s1 + $0x18] sm:$0xf]
      %v459 = vld [vmem:[%s1 + $0x1c] sm:$0xf]
      %v460 = vld [vmem:[%s1 + $0x20] sm:$0xf]
      %v461 = vld [vmem:[%s1 + $0x24] sm:$0xf]
      %v462 = vld [vmem:[%s1 + $0x28] sm:$0xf]
      %v463 = vld [vmem:[%s1 + $0x2c] sm:$0xf]
      %v464 = vld [vmem:[%s1 + $0x30] sm:$0xf]
      %v465 = vld [vmem:[%s1 + $0x34] sm:$0xf]
      %v466 = vld [vmem:[%s1 + $0x38] sm:$0xf]
      %v467 = vld [vmem:[%s1 + $0x3c] sm:$0xf]
      %s468 = scalar_lea.vmem %s2, 8
      %v469 = vld [vmem:[%s468] sm:$0xf]
      %v470 = vld [vmem:[%s468 + $0x4] sm:$0xf]
      %v473 = vunpack.c.l.b16 %v469
      %v474 = vunpack.c.l.b16 %v470
      %v475 = vpack.c.b16 %v474, %v473
      %477 = vmatprep.subr.bf16.mxu0 0
      %478 = vmatpush1.bf16.msra.mxu0 0
      %479 = vmatprep.subr.bf16.mxu0 0
      %480 = vmatpush1.bf16.msra.mxu0 0
      %481 = vmatprep.subr.bf16.mxu0 0
      %482 = vmatpush1.bf16.msra.mxu0 0
      %483 = vmatprep.subr.bf16.mxu0 0
      %484 = vmatpush1.bf16.msra.mxu0 0
      %485 = vmatprep.subr.bf16.mxu0 0
      %486 = vmatpush1.bf16.msra.mxu0 0
      %487 = vmatprep.subr.bf16.mxu0 0
      %488 = vmatpush1.bf16.msra.mxu0 0
      %489 = vmatprep.subr.bf16.mxu0 0
      %490 = vmatpush1.bf16.msra.mxu0 0
      %491 = vmatprep.subr.bf16.mxu0 0
      %492 = vmatpush1.bf16.msra.mxu0 %v475
      %493 = vmatprep.subr.bf16.mxu0 0
      %494 = vmatpush2.bf16.msra.mxu0 0
      %495 = vmatprep.subr.bf16.mxu0 0
      %496 = vmatpush2.bf16.msra.mxu0 0
      %497 = vmatprep.subr.bf16.mxu0 0
      %498 = vmatpush2.bf16.msra.mxu0 0
      %499 = vmatprep.subr.bf16.mxu0 0
      %500 = vmatpush2.bf16.msra.mxu0 0
      %501 = vmatprep.subr.bf16.mxu0 0
      %502 = vmatpush2.bf16.msra.mxu0 0
      %503 = vmatprep.subr.bf16.mxu0 0
      %504 = vmatpush2.bf16.msra.mxu0 0
      %505 = vmatprep.subr.bf16.mxu0 0
      %506 = vmatpush2.bf16.msra.mxu0 0
      %507 = vmatprep.subr.bf16.mxu0 0
      %508 = vmatpush2.bf16.msra.mxu0 0
      %509 = vmatprep.mubr.bf16.mxu0 0
      %510 = vmatmul.mubr.bf16.gmra.mxu0 %v372
      %v511 = vpop.f32.mrf.mxu0
      %v512 = vadd.f32 0.0, %v511
      %v513 = vpop.f32.mrf.mxu0
      %v514 = vpop.f32.mrf.mxu0
      %v515 = vadd.f32 0.0, %v514
      %v516 = vpop.f32.mrf.mxu0
      %517 = vmatprep.mubr.bf16.mxu0 0
      %518 = vmatmul.mubr.bf16.gmra.mxu0 %v375
      %v519 = vpop.f32.mrf.mxu0
      %v520 = vadd.f32 0.0, %v519
      %v521 = vpop.f32.mrf.mxu0
      %v522 = vpop.f32.mrf.mxu0
      %v523 = vadd.f32 0.0, %v522
      %v524 = vpop.f32.mrf.mxu0
      %525 = vmatprep.mubr.bf16.mxu0 0
      %526 = vmatmul.mubr.bf16.gmra.mxu0 %v378
      %v527 = vpop.f32.mrf.mxu0
      %v528 = vadd.f32 0.0, %v527
      %v529 = vpop.f32.mrf.mxu0
      %v530 = vpop.f32.mrf.mxu0
      %v531 = vadd.f32 0.0, %v530
      %v532 = vpop.f32.mrf.mxu0
      %533 = vmatprep.mubr.bf16.mxu0 0
      %534 = vmatmul.mubr.bf16.gmra.mxu0 %v381
      %v535 = vpop.f32.mrf.mxu0
      %v536 = vadd.f32 0.0, %v535
      %v537 = vpop.f32.mrf.mxu0
      %v538 = vpop.f32.mrf.mxu0
      %v539 = vadd.f32 0.0, %v538
      %v540 = vpop.f32.mrf.mxu0
      %541 = vdwg.mxu0
      %v542 = vpack.c.bf16 %v515, %v512
      %v543 = vpack.c.bf16 %v523, %v520
      %v544 = vpack.c.bf16 %v531, %v528
      %v545 = vpack.c.bf16 %v539, %v536
      %s546 = scalar_lea.vmem %s1, 64
      %v547 = vld [vmem:[%s546] sm:$0xf]
      %v548 = vld [vmem:[%s546 + $0x4] sm:$0xf]
      %v549 = vld [vmem:[%s546 + $0x8] sm:$0xf]
      %v550 = vld [vmem:[%s546 + $0xc] sm:$0xf]
      %v551 = vld [vmem:[%s546 + $0x10] sm:$0xf]
      %v552 = vld [vmem:[%s546 + $0x14] sm:$0xf]
      %v553 = vld [vmem:[%s546 + $0x18] sm:$0xf]
      %v554 = vld [vmem:[%s546 + $0x1c] sm:$0xf]
      %v555 = vld [vmem:[%s546 + $0x20] sm:$0xf]
      %v556 = vld [vmem:[%s546 + $0x24] sm:$0xf]
      %v557 = vld [vmem:[%s546 + $0x28] sm:$0xf]
      %v558 = vld [vmem:[%s546 + $0x2c] sm:$0xf]
      %v559 = vld [vmem:[%s546 + $0x30] sm:$0xf]
      %v560 = vld [vmem:[%s546 + $0x34] sm:$0xf]
      %v561 = vld [vmem:[%s546 + $0x38] sm:$0xf]
      %v562 = vld [vmem:[%s546 + $0x3c] sm:$0xf]
      %v579 = vunpack.c.l.b16 %v547
      %v580 = vunpack.c.l.b16 %v548
      %v581 = vunpack.c.l.b16 %v549
      %v582 = vunpack.c.l.b16 %v550
      %v583 = vunpack.c.l.b16 %v551
      %v584 = vunpack.c.l.b16 %v552
      %v585 = vunpack.c.l.b16 %v553
      %v586 = vunpack.c.l.b16 %v554
      %v587 = vunpack.c.l.b16 %v555
      %v588 = vunpack.c.l.b16 %v556
      %v589 = vunpack.c.l.b16 %v557
      %v590 = vunpack.c.l.b16 %v558
      %v591 = vunpack.c.l.b16 %v559
      %v592 = vunpack.c.l.b16 %v560
      %v593 = vunpack.c.l.b16 %v561
      %v594 = vunpack.c.l.b16 %v562
      %v595 = vpack.c.b16 %v580, %v579
      %v596 = vpack.c.b16 %v582, %v581
      %v597 = vpack.c.b16 %v584, %v583
      %v598 = vpack.c.b16 %v586, %v585
      %v599 = vpack.c.b16 %v588, %v587
      %v600 = vpack.c.b16 %v590, %v589
      %v601 = vpack.c.b16 %v592, %v591
      %v602 = vpack.c.b16 %v594, %v593
      %vm603 = vcmask 523264
      %v605 = vsel %vm603, %v595, 0
      %v608 = vsel %vm603, %v596, 0
      %v611 = vsel %vm603, %v597, 0
      %v614 = vsel %vm603, %v598, 0
      %v617 = vsel %vm603, %v599, 0
      %v620 = vsel %vm603, %v600, 0
      %v623 = vsel %vm603, %v601, 0
      %v626 = vsel %vm603, %v602, 0
      %628 = vmatprep.subr.bf16.mxu0 0
      %629 = vmatpush1.bf16.msra.mxu0 0
      %630 = vmatprep.subr.bf16.mxu0 0
      %631 = vmatpush1.bf16.msra.mxu0 0
      %632 = vmatprep.subr.bf16.mxu0 0
      %633 = vmatpush1.bf16.msra.mxu0 0
      %634 = vmatprep.subr.bf16.mxu0 0
      %635 = vmatpush1.bf16.msra.mxu0 0
      %636 = vmatprep.subr.bf16.mxu0 0
      %637 = vmatpush1.bf16.msra.mxu0 %v545
      %638 = vmatprep.subr.bf16.mxu0 0
      %639 = vmatpush1.bf16.msra.mxu0 %v544
      %640 = vmatprep.subr.bf16.mxu0 0
      %641 = vmatpush1.bf16.msra.mxu0 %v543
      %642 = vmatprep.subr.bf16.mxu0 0
      %643 = vmatpush1.bf16.msra.mxu0 %v542
      %644 = vmatprep.subr.bf16.mxu0 0
      %645 = vmatpush2.bf16.msra.mxu0 0
      %646 = vmatprep.subr.bf16.mxu0 0
      %647 = vmatpush2.bf16.msra.mxu0 0
      %648 = vmatprep.subr.bf16.mxu0 0
      %649 = vmatpush2.bf16.msra.mxu0 0
      %650 = vmatprep.subr.bf16.mxu0 0
      %651 = vmatpush2.bf16.msra.mxu0 0
      %652 = vmatprep.subr.bf16.mxu0 0
      %653 = vmatpush2.bf16.msra.mxu0 0
      %654 = vmatprep.subr.bf16.mxu0 0
      %655 = vmatpush2.bf16.msra.mxu0 0
      %656 = vmatprep.subr.bf16.mxu0 0
      %657 = vmatpush2.bf16.msra.mxu0 0
      %658 = vmatprep.subr.bf16.mxu0 0
      %659 = vmatpush2.bf16.msra.mxu0 0
      %660 = vmatprep.mubr.bf16.mxu0 0
      %661 = vmatmul.mubr.bf16.gmra.mxu0 %v605
      %v662 = vpop.f32.mrf.mxu0
      %v663 = vadd.f32 0.0, %v662
      %v664 = vpop.f32.mrf.mxu0
      %v665 = vpop.f32.mrf.mxu0
      %v666 = vadd.f32 0.0, %v665
      %v667 = vpop.f32.mrf.mxu0
      %668 = vmatprep.mubr.bf16.mxu0 0
      %669 = vmatmul.mubr.bf16.gmra.mxu0 %v608
      %v670 = vpop.f32.mrf.mxu0
      %v671 = vadd.f32 0.0, %v670
      %v672 = vpop.f32.mrf.mxu0
      %v673 = vpop.f32.mrf.mxu0
      %v674 = vadd.f32 0.0, %v673
      %v675 = vpop.f32.mrf.mxu0
      %676 = vmatprep.mubr.bf16.mxu0 0
      %677 = vmatmul.mubr.bf16.gmra.mxu0 %v611
      %v678 = vpop.f32.mrf.mxu0
      %v679 = vadd.f32 0.0, %v678
      %v680 = vpop.f32.mrf.mxu0
      %v681 = vpop.f32.mrf.mxu0
      %v682 = vadd.f32 0.0, %v681
      %v683 = vpop.f32.mrf.mxu0
      %684 = vmatprep.mubr.bf16.mxu0 0
      %685 = vmatmul.mubr.bf16.gmra.mxu0 %v614
      %v686 = vpop.f32.mrf.mxu0
      %v687 = vadd.f32 0.0, %v686
      %v688 = vpop.f32.mrf.mxu0
      %v689 = vpop.f32.mrf.mxu0
      %v690 = vadd.f32 0.0, %v689
      %v691 = vpop.f32.mrf.mxu0
      %692 = vmatprep.mubr.bf16.mxu0 0
      %693 = vmatmul.mubr.bf16.gmra.mxu0 %v617
      %v694 = vpop.f32.mrf.mxu0
      %v695 = vadd.f32 0.0, %v694
      %v696 = vpop.f32.mrf.mxu0
      %v697 = vpop.f32.mrf.mxu0
      %v698 = vadd.f32 0.0, %v697
      %v699 = vpop.f32.mrf.mxu0
      %700 = vmatprep.mubr.bf16.mxu0 0
      %701 = vmatmul.mubr.bf16.gmra.mxu0 %v620
      %v702 = vpop.f32.mrf.mxu0
      %v703 = vadd.f32 0.0, %v702
      %v704 = vpop.f32.mrf.mxu0
      %v705 = vpop.f32.mrf.mxu0
      %v706 = vadd.f32 0.0, %v705
      %v707 = vpop.f32.mrf.mxu0
      %708 = vmatprep.mubr.bf16.mxu0 0
      %709 = vmatmul.mubr.bf16.gmra.mxu0 %v623
      %v710 = vpop.f32.mrf.mxu0
      %v711 = vadd.f32 0.0, %v710
      %v712 = vpop.f32.mrf.mxu0
      %v713 = vpop.f32.mrf.mxu0
      %v714 = vadd.f32 0.0, %v713
      %v715 = vpop.f32.mrf.mxu0
      %716 = vmatprep.mubr.bf16.mxu0 0
      %717 = vmatmul.mubr.bf16.gmra.mxu0 %v626
      %v718 = vpop.f32.mrf.mxu0
      %v719 = vadd.f32 0.0, %v718
      %v720 = vpop.f32.mrf.mxu0
      %v721 = vpop.f32.mrf.mxu0
      %v722 = vadd.f32 0.0, %v721
      %v723 = vpop.f32.mrf.mxu0
      %724 = vdwg.mxu0
      %v741 = vunpack.c.l.b16 %v452
      %v742 = vunpack.c.l.b16 %v453
      %v743 = vunpack.c.l.b16 %v454
      %v744 = vunpack.c.l.b16 %v455
      %v745 = vunpack.c.l.b16 %v456
      %v746 = vunpack.c.l.b16 %v457
      %v747 = vunpack.c.l.b16 %v458
      %v748 = vunpack.c.l.b16 %v459
      %v749 = vunpack.c.l.b16 %v460
      %v750 = vunpack.c.l.b16 %v461
      %v751 = vunpack.c.l.b16 %v462
      %v752 = vunpack.c.l.b16 %v463
      %v753 = vunpack.c.l.b16 %v464
      %v754 = vunpack.c.l.b16 %v465
      %v755 = vunpack.c.l.b16 %v466
      %v756 = vunpack.c.l.b16 %v467
      %v757 = vpack.c.b16 %v742, %v741
      %v758 = vpack.c.b16 %v744, %v743
      %v759 = vpack.c.b16 %v746, %v745
      %v760 = vpack.c.b16 %v748, %v747
      %v761 = vpack.c.b16 %v750, %v749
      %v762 = vpack.c.b16 %v752, %v751
      %v763 = vpack.c.b16 %v754, %v753
      %v764 = vpack.c.b16 %v756, %v755
      %v766 = vsel %vm603, %v757, 0
      %v769 = vsel %vm603, %v758, 0
      %v772 = vsel %vm603, %v759, 0
      %v775 = vsel %vm603, %v760, 0
      %v778 = vsel %vm603, %v761, 0
      %v781 = vsel %vm603, %v762, 0
      %v784 = vsel %vm603, %v763, 0
      %v787 = vsel %vm603, %v764, 0
      %789 = vmatprep.subr.bf16.mxu0 0
      %790 = vmatpush1.bf16.msra.mxu0 0
      %791 = vmatprep.subr.bf16.mxu0 0
      %792 = vmatpush1.bf16.msra.mxu0 0
      %793 = vmatprep.subr.bf16.mxu0 0
      %794 = vmatpush1.bf16.msra.mxu0 0
      %795 = vmatprep.subr.bf16.mxu0 0
      %796 = vmatpush1.bf16.msra.mxu0 0
      %797 = vmatprep.subr.bf16.mxu0 0
      %798 = vmatpush1.bf16.msra.mxu0 %v451
      %799 = vmatprep.subr.bf16.mxu0 0
      %800 = vmatpush1.bf16.msra.mxu0 %v450
      %801 = vmatprep.subr.bf16.mxu0 0
      %802 = vmatpush1.bf16.msra.mxu0 %v449
      %803 = vmatprep.subr.bf16.mxu0 0
      %804 = vmatpush1.bf16.msra.mxu0 %v448
      %805 = vmatprep.subr.bf16.mxu0 0
      %806 = vmatpush2.bf16.msra.mxu0 0
      %807 = vmatprep.subr.bf16.mxu0 0
      %808 = vmatpush2.bf16.msra.mxu0 0
      %809 = vmatprep.subr.bf16.mxu0 0
      %810 = vmatpush2.bf16.msra.mxu0 0
      %811 = vmatprep.subr.bf16.mxu0 0
      %812 = vmatpush2.bf16.msra.mxu0 0
      %813 = vmatprep.subr.bf16.mxu0 0
      %814 = vmatpush2.bf16.msra.mxu0 0
      %815 = vmatprep.subr.bf16.mxu0 0
      %816 = vmatpush2.bf16.msra.mxu0 0
      %817 = vmatprep.subr.bf16.mxu0 0
      %818 = vmatpush2.bf16.msra.mxu0 0
      %819 = vmatprep.subr.bf16.mxu0 0
      %820 = vmatpush2.bf16.msra.mxu0 0
      %821 = vmatprep.mubr.bf16.mxu0 0
      %822 = vmatmul.mubr.bf16.gmra.mxu0 %v766
      %v823 = vpop.f32.mrf.mxu0
      %v824 = vadd.f32 %v663, %v823
      %v825 = vpop.f32.mrf.mxu0
      %v826 = vpop.f32.mrf.mxu0
      %v827 = vadd.f32 %v666, %v826
      %v828 = vpop.f32.mrf.mxu0
      %829 = vmatprep.mubr.bf16.mxu0 0
      %830 = vmatmul.mubr.bf16.gmra.mxu0 %v769
      %v831 = vpop.f32.mrf.mxu0
      %v832 = vadd.f32 %v671, %v831
      %v833 = vpop.f32.mrf.mxu0
      %v834 = vpop.f32.mrf.mxu0
      %v835 = vadd.f32 %v674, %v834
      %v836 = vpop.f32.mrf.mxu0
      %837 = vmatprep.mubr.bf16.mxu0 0
      %838 = vmatmul.mubr.bf16.gmra.mxu0 %v772
      %v839 = vpop.f32.mrf.mxu0
      %v840 = vadd.f32 %v679, %v839
      %v841 = vpop.f32.mrf.mxu0
      %v842 = vpop.f32.mrf.mxu0
      %v843 = vadd.f32 %v682, %v842
      %v844 = vpop.f32.mrf.mxu0
      %845 = vmatprep.mubr.bf16.mxu0 0
      %846 = vmatmul.mubr.bf16.gmra.mxu0 %v775
      %v847 = vpop.f32.mrf.mxu0
      %v848 = vadd.f32 %v687, %v847
      %v849 = vpop.f32.mrf.mxu0
      %v850 = vpop.f32.mrf.mxu0
      %v851 = vadd.f32 %v690, %v850
      %v852 = vpop.f32.mrf.mxu0
      %853 = vmatprep.mubr.bf16.mxu0 0
      %854 = vmatmul.mubr.bf16.gmra.mxu0 %v778
      %v855 = vpop.f32.mrf.mxu0
      %v856 = vadd.f32 %v695, %v855
      %v857 = vpop.f32.mrf.mxu0
      %v858 = vpop.f32.mrf.mxu0
      %v859 = vadd.f32 %v698, %v858
      %v860 = vpop.f32.mrf.mxu0
      %861 = vmatprep.mubr.bf16.mxu0 0
      %862 = vmatmul.mubr.bf16.gmra.mxu0 %v781
      %v863 = vpop.f32.mrf.mxu0
      %v864 = vadd.f32 %v703, %v863
      %v865 = vpop.f32.mrf.mxu0
      %v866 = vpop.f32.mrf.mxu0
      %v867 = vadd.f32 %v706, %v866
      %v868 = vpop.f32.mrf.mxu0
      %869 = vmatprep.mubr.bf16.mxu0 0
      %870 = vmatmul.mubr.bf16.gmra.mxu0 %v784
      %v871 = vpop.f32.mrf.mxu0
      %v872 = vadd.f32 %v711, %v871
      %v873 = vpop.f32.mrf.mxu0
      %v874 = vpop.f32.mrf.mxu0
      %v875 = vadd.f32 %v714, %v874
      %v876 = vpop.f32.mrf.mxu0
      %877 = vmatprep.mubr.bf16.mxu0 0
      %878 = vmatmul.mubr.bf16.gmra.mxu0 %v787
      %v879 = vpop.f32.mrf.mxu0
      %v880 = vadd.f32 %v719, %v879
      %v881 = vpop.f32.mrf.mxu0
      %v882 = vpop.f32.mrf.mxu0
      %v883 = vadd.f32 %v722, %v882
      %v884 = vpop.f32.mrf.mxu0
      %885 = vdwg.mxu0
      %s886 = scalar_lea.vmem %s2, 16
      %v887 = vld [vmem:[%s886] sm:$0xf]
      %v888 = vld [vmem:[%s886 + $0x4] sm:$0xf]
      %v891 = vunpack.c.l.b16 %v887
      %v892 = vunpack.c.l.b16 %v888
      %v893 = vpack.c.b16 %v892, %v891
      %895 = vmatprep.subr.bf16.mxu0 0
      %896 = vmatpush1.bf16.msra.mxu0 0
      %897 = vmatprep.subr.bf16.mxu0 0
      %898 = vmatpush1.bf16.msra.mxu0 0
      %899 = vmatprep.subr.bf16.mxu0 0
      %900 = vmatpush1.bf16.msra.mxu0 0
      %901 = vmatprep.subr.bf16.mxu0 0
      %902 = vmatpush1.bf16.msra.mxu0 0
      %903 = vmatprep.subr.bf16.mxu0 0
      %904 = vmatpush1.bf16.msra.mxu0 0
      %905 = vmatprep.subr.bf16.mxu0 0
      %906 = vmatpush1.bf16.msra.mxu0 0
      %907 = vmatprep.subr.bf16.mxu0 0
      %908 = vmatpush1.bf16.msra.mxu0 0
      %909 = vmatprep.subr.bf16.mxu0 0
      %910 = vmatpush1.bf16.msra.mxu0 %v893
      %911 = vmatprep.subr.bf16.mxu0 0
      %912 = vmatpush2.bf16.msra.mxu0 0
      %913 = vmatprep.subr.bf16.mxu0 0
      %914 = vmatpush2.bf16.msra.mxu0 0
      %915 = vmatprep.subr.bf16.mxu0 0
      %916 = vmatpush2.bf16.msra.mxu0 0
      %917 = vmatprep.subr.bf16.mxu0 0
      %918 = vmatpush2.bf16.msra.mxu0 0
      %919 = vmatprep.subr.bf16.mxu0 0
      %920 = vmatpush2.bf16.msra.mxu0 0
      %921 = vmatprep.subr.bf16.mxu0 0
      %922 = vmatpush2.bf16.msra.mxu0 0
      %923 = vmatprep.subr.bf16.mxu0 0
      %924 = vmatpush2.bf16.msra.mxu0 0
      %925 = vmatprep.subr.bf16.mxu0 0
      %926 = vmatpush2.bf16.msra.mxu0 0
      %927 = vmatprep.mubr.bf16.mxu0 0
      %928 = vmatmul.mubr.bf16.gmra.mxu0 %v372
      %v929 = vpop.f32.mrf.mxu0
      %v930 = vadd.f32 0.0, %v929
      %v931 = vpop.f32.mrf.mxu0
      %v932 = vpop.f32.mrf.mxu0
      %v933 = vadd.f32 0.0, %v932
      %v934 = vpop.f32.mrf.mxu0
      %935 = vmatprep.mubr.bf16.mxu0 0
      %936 = vmatmul.mubr.bf16.gmra.mxu0 %v375
      %v937 = vpop.f32.mrf.mxu0
      %v938 = vadd.f32 0.0, %v937
      %v939 = vpop.f32.mrf.mxu0
      %v940 = vpop.f32.mrf.mxu0
      %v941 = vadd.f32 0.0, %v940
      %v942 = vpop.f32.mrf.mxu0
      %943 = vmatprep.mubr.bf16.mxu0 0
      %944 = vmatmul.mubr.bf16.gmra.mxu0 %v378
      %v945 = vpop.f32.mrf.mxu0
      %v946 = vadd.f32 0.0, %v945
      %v947 = vpop.f32.mrf.mxu0
      %v948 = vpop.f32.mrf.mxu0
      %v949 = vadd.f32 0.0, %v948
      %v950 = vpop.f32.mrf.mxu0
      %951 = vmatprep.mubr.bf16.mxu0 0
      %952 = vmatmul.mubr.bf16.gmra.mxu0 %v381
      %v953 = vpop.f32.mrf.mxu0
      %v954 = vadd.f32 0.0, %v953
      %v955 = vpop.f32.mrf.mxu0
      %v956 = vpop.f32.mrf.mxu0
      %v957 = vadd.f32 0.0, %v956
      %v958 = vpop.f32.mrf.mxu0
      %959 = vdwg.mxu0
      %v960 = vpack.c.bf16 %v933, %v930
      %v961 = vpack.c.bf16 %v941, %v938
      %v962 = vpack.c.bf16 %v949, %v946
      %v963 = vpack.c.bf16 %v957, %v954
      %s964 = scalar_lea.vmem %s1, 128
      %v965 = vld [vmem:[%s964] sm:$0xf]
      %v966 = vld [vmem:[%s964 + $0x4] sm:$0xf]
      %v967 = vld [vmem:[%s964 + $0x8] sm:$0xf]
      %v968 = vld [vmem:[%s964 + $0xc] sm:$0xf]
      %v969 = vld [vmem:[%s964 + $0x10] sm:$0xf]
      %v970 = vld [vmem:[%s964 + $0x14] sm:$0xf]
      %v971 = vld [vmem:[%s964 + $0x18] sm:$0xf]
      %v972 = vld [vmem:[%s964 + $0x1c] sm:$0xf]
      %v973 = vld [vmem:[%s964 + $0x20] sm:$0xf]
      %v974 = vld [vmem:[%s964 + $0x24] sm:$0xf]
      %v975 = vld [vmem:[%s964 + $0x28] sm:$0xf]
      %v976 = vld [vmem:[%s964 + $0x2c] sm:$0xf]
      %v977 = vld [vmem:[%s964 + $0x30] sm:$0xf]
      %v978 = vld [vmem:[%s964 + $0x34] sm:$0xf]
      %v979 = vld [vmem:[%s964 + $0x38] sm:$0xf]
      %v980 = vld [vmem:[%s964 + $0x3c] sm:$0xf]
      %v997 = vunpack.c.l.b16 %v965
      %v998 = vunpack.c.l.b16 %v966
      %v999 = vunpack.c.l.b16 %v967
      %v1000 = vunpack.c.l.b16 %v968
      %v1001 = vunpack.c.l.b16 %v969
      %v1002 = vunpack.c.l.b16 %v970
      %v1003 = vunpack.c.l.b16 %v971
      %v1004 = vunpack.c.l.b16 %v972
      %v1005 = vunpack.c.l.b16 %v973
      %v1006 = vunpack.c.l.b16 %v974
      %v1007 = vunpack.c.l.b16 %v975
      %v1008 = vunpack.c.l.b16 %v976
      %v1009 = vunpack.c.l.b16 %v977
      %v1010 = vunpack.c.l.b16 %v978
      %v1011 = vunpack.c.l.b16 %v979
      %v1012 = vunpack.c.l.b16 %v980
      %v1013 = vpack.c.b16 %v998, %v997
      %v1014 = vpack.c.b16 %v1000, %v999
      %v1015 = vpack.c.b16 %v1002, %v1001
      %v1016 = vpack.c.b16 %v1004, %v1003
      %v1017 = vpack.c.b16 %v1006, %v1005
      %v1018 = vpack.c.b16 %v1008, %v1007
      %v1019 = vpack.c.b16 %v1010, %v1009
      %v1020 = vpack.c.b16 %v1012, %v1011
      %v1022 = vsel %vm603, %v1013, 0
      %v1025 = vsel %vm603, %v1014, 0
      %v1028 = vsel %vm603, %v1015, 0
      %v1031 = vsel %vm603, %v1016, 0
      %v1034 = vsel %vm603, %v1017, 0
      %v1037 = vsel %vm603, %v1018, 0
      %v1040 = vsel %vm603, %v1019, 0
      %v1043 = vsel %vm603, %v1020, 0
      %1045 = vmatprep.subr.bf16.mxu0 0
      %1046 = vmatpush1.bf16.msra.mxu0 0
      %1047 = vmatprep.subr.bf16.mxu0 0
      %1048 = vmatpush1.bf16.msra.mxu0 0
      %1049 = vmatprep.subr.bf16.mxu0 0
      %1050 = vmatpush1.bf16.msra.mxu0 0
      %1051 = vmatprep.subr.bf16.mxu0 0
      %1052 = vmatpush1.bf16.msra.mxu0 0
      %1053 = vmatprep.subr.bf16.mxu0 0
      %1054 = vmatpush1.bf16.msra.mxu0 %v963
      %1055 = vmatprep.subr.bf16.mxu0 0
      %1056 = vmatpush1.bf16.msra.mxu0 %v962
      %1057 = vmatprep.subr.bf16.mxu0 0
      %1058 = vmatpush1.bf16.msra.mxu0 %v961
      %1059 = vmatprep.subr.bf16.mxu0 0
      %1060 = vmatpush1.bf16.msra.mxu0 %v960
      %1061 = vmatprep.subr.bf16.mxu0 0
      %1062 = vmatpush2.bf16.msra.mxu0 0
      %1063 = vmatprep.subr.bf16.mxu0 0
      %1064 = vmatpush2.bf16.msra.mxu0 0
      %1065 = vmatprep.subr.bf16.mxu0 0
      %1066 = vmatpush2.bf16.msra.mxu0 0
      %1067 = vmatprep.subr.bf16.mxu0 0
      %1068 = vmatpush2.bf16.msra.mxu0 0
      %1069 = vmatprep.subr.bf16.mxu0 0
      %1070 = vmatpush2.bf16.msra.mxu0 0
      %1071 = vmatprep.subr.bf16.mxu0 0
      %1072 = vmatpush2.bf16.msra.mxu0 0
      %1073 = vmatprep.subr.bf16.mxu0 0
      %1074 = vmatpush2.bf16.msra.mxu0 0
      %1075 = vmatprep.subr.bf16.mxu0 0
      %1076 = vmatpush2.bf16.msra.mxu0 0
      %1077 = vmatprep.mubr.bf16.mxu0 0
      %1078 = vmatmul.mubr.bf16.gmra.mxu0 %v1022
      %v1079 = vpop.f32.mrf.mxu0
      %v1080 = vadd.f32 0.0, %v1079
      %v1081 = vpop.f32.mrf.mxu0
      %v1082 = vpop.f32.mrf.mxu0
      %v1083 = vadd.f32 0.0, %v1082
      %v1084 = vpop.f32.mrf.mxu0
      %1085 = vmatprep.mubr.bf16.mxu0 0
      %1086 = vmatmul.mubr.bf16.gmra.mxu0 %v1025
      %v1087 = vpop.f32.mrf.mxu0
      %v1088 = vadd.f32 0.0, %v1087
      %v1089 = vpop.f32.mrf.mxu0
      %v1090 = vpop.f32.mrf.mxu0
      %v1091 = vadd.f32 0.0, %v1090
      %v1092 = vpop.f32.mrf.mxu0
      %1093 = vmatprep.mubr.bf16.mxu0 0
      %1094 = vmatmul.mubr.bf16.gmra.mxu0 %v1028
      %v1095 = vpop.f32.mrf.mxu0
      %v1096 = vadd.f32 0.0, %v1095
      %v1097 = vpop.f32.mrf.mxu0
      %v1098 = vpop.f32.mrf.mxu0
      %v1099 = vadd.f32 0.0, %v1098
      %v1100 = vpop.f32.mrf.mxu0
      %1101 = vmatprep.mubr.bf16.mxu0 0
      %1102 = vmatmul.mubr.bf16.gmra.mxu0 %v1031
      %v1103 = vpop.f32.mrf.mxu0
      %v1104 = vadd.f32 0.0, %v1103
      %v1105 = vpop.f32.mrf.mxu0
      %v1106 = vpop.f32.mrf.mxu0
      %v1107 = vadd.f32 0.0, %v1106
      %v1108 = vpop.f32.mrf.mxu0
      %1109 = vmatprep.mubr.bf16.mxu0 0
      %1110 = vmatmul.mubr.bf16.gmra.mxu0 %v1034
      %v1111 = vpop.f32.mrf.mxu0
      %v1112 = vadd.f32 0.0, %v1111
      %v1113 = vpop.f32.mrf.mxu0
      %v1114 = vpop.f32.mrf.mxu0
      %v1115 = vadd.f32 0.0, %v1114
      %v1116 = vpop.f32.mrf.mxu0
      %1117 = vmatprep.mubr.bf16.mxu0 0
      %1118 = vmatmul.mubr.bf16.gmra.mxu0 %v1037
      %v1119 = vpop.f32.mrf.mxu0
      %v1120 = vadd.f32 0.0, %v1119
      %v1121 = vpop.f32.mrf.mxu0
      %v1122 = vpop.f32.mrf.mxu0
      %v1123 = vadd.f32 0.0, %v1122
      %v1124 = vpop.f32.mrf.mxu0
      %1125 = vmatprep.mubr.bf16.mxu0 0
      %1126 = vmatmul.mubr.bf16.gmra.mxu0 %v1040
      %v1127 = vpop.f32.mrf.mxu0
      %v1128 = vadd.f32 0.0, %v1127
      %v1129 = vpop.f32.mrf.mxu0
      %v1130 = vpop.f32.mrf.mxu0
      %v1131 = vadd.f32 0.0, %v1130
      %v1132 = vpop.f32.mrf.mxu0
      %1133 = vmatprep.mubr.bf16.mxu0 0
      %1134 = vmatmul.mubr.bf16.gmra.mxu0 %v1043
      %v1135 = vpop.f32.mrf.mxu0
      %v1136 = vadd.f32 0.0, %v1135
      %v1137 = vpop.f32.mrf.mxu0
      %v1138 = vpop.f32.mrf.mxu0
      %v1139 = vadd.f32 0.0, %v1138
      %v1140 = vpop.f32.mrf.mxu0
      %1141 = vdwg.mxu0
      %v1142 = vadd.f32 %v824, %v1080
      %v1143 = vadd.f32 %v827, %v1083
      %v1144 = vadd.f32 %v832, %v1088
      %v1145 = vadd.f32 %v835, %v1091
      %v1146 = vadd.f32 %v840, %v1096
      %v1147 = vadd.f32 %v843, %v1099
      %v1148 = vadd.f32 %v848, %v1104
      %v1149 = vadd.f32 %v851, %v1107
      %v1150 = vadd.f32 %v856, %v1112
      %v1151 = vadd.f32 %v859, %v1115
      %v1152 = vadd.f32 %v864, %v1120
      %v1153 = vadd.f32 %v867, %v1123
      %v1154 = vadd.f32 %v872, %v1128
      %v1155 = vadd.f32 %v875, %v1131
      %v1156 = vadd.f32 %v880, %v1136
      %v1157 = vadd.f32 %v883, %v1139
      %v1158 = vld [vmem:[%s3] sm:$0xff]
      %v1159 = vld [vmem:[%s3 + $0x8] sm:$0xff]
      %v1160 = vld [vmem:[%s3 + $0x10] sm:$0xff]
      %v1161 = vld [vmem:[%s3 + $0x18] sm:$0xff]
      %v1162 = vld [vmem:[%s3 + $0x20] sm:$0xff]
      %v1163 = vld [vmem:[%s3 + $0x28] sm:$0xff]
      %v1164 = vld [vmem:[%s3 + $0x30] sm:$0xff]
      %v1165 = vld [vmem:[%s3 + $0x38] sm:$0xff]
      %v1166 = vld [vmem:[%s3 + $0x40] sm:$0xff]
      %v1167 = vld [vmem:[%s3 + $0x48] sm:$0xff]
      %v1168 = vld [vmem:[%s3 + $0x50] sm:$0xff]
      %v1169 = vld [vmem:[%s3 + $0x58] sm:$0xff]
      %v1170 = vld [vmem:[%s3 + $0x60] sm:$0xff]
      %v1171 = vld [vmem:[%s3 + $0x68] sm:$0xff]
      %v1172 = vld [vmem:[%s3 + $0x70] sm:$0xff]
      %v1173 = vld [vmem:[%s3 + $0x78] sm:$0xff]
      %1175 = vset.pattern.permute.xlu0 0
      %1176 = vperm.xlu0 %1175, %v1158
      %v1177 = vpop.permute.xlu0 %1176
      %1180 = vset.pattern.permute.xlu0 0
      %1181 = vperm.xlu0 %1180, %v1159
      %v1182 = vpop.permute.xlu0 %1181
      %1185 = vset.pattern.permute.xlu0 0
      %1186 = vperm.xlu0 %1185, %v1160
      %v1187 = vpop.permute.xlu0 %1186
      %1190 = vset.pattern.permute.xlu0 0
      %1191 = vperm.xlu0 %1190, %v1161
      %v1192 = vpop.permute.xlu0 %1191
      %1195 = vset.pattern.permute.xlu0 0
      %1196 = vperm.xlu0 %1195, %v1162
      %v1197 = vpop.permute.xlu0 %1196
      %1200 = vset.pattern.permute.xlu0 0
      %1201 = vperm.xlu0 %1200, %v1163
      %v1202 = vpop.permute.xlu0 %1201
      %1205 = vset.pattern.permute.xlu0 0
      %1206 = vperm.xlu0 %1205, %v1164
      %v1207 = vpop.permute.xlu0 %1206
      %1210 = vset.pattern.permute.xlu0 0
      %1211 = vperm.xlu0 %1210, %v1165
      %v1212 = vpop.permute.xlu0 %1211
      %1215 = vset.pattern.permute.xlu0 0
      %1216 = vperm.xlu0 %1215, %v1166
      %v1217 = vpop.permute.xlu0 %1216
      %1220 = vset.pattern.permute.xlu0 0
      %1221 = vperm.xlu0 %1220, %v1167
      %v1222 = vpop.permute.xlu0 %1221
      %1225 = vset.pattern.permute.xlu0 0
      %1226 = vperm.xlu0 %1225, %v1168
      %v1227 = vpop.permute.xlu0 %1226
      %1230 = vset.pattern.permute.xlu0 0
      %1231 = vperm.xlu0 %1230, %v1169
      %v1232 = vpop.permute.xlu0 %1231
      %1235 = vset.pattern.permute.xlu0 0
      %1236 = vperm.xlu0 %1235, %v1170
      %v1237 = vpop.permute.xlu0 %1236
      %1240 = vset.pattern.permute.xlu0 0
      %1241 = vperm.xlu0 %1240, %v1171
      %v1242 = vpop.permute.xlu0 %1241
      %1245 = vset.pattern.permute.xlu0 0
      %1246 = vperm.xlu0 %1245, %v1172
      %v1247 = vpop.permute.xlu0 %1246
      %1250 = vset.pattern.permute.xlu0 0
      %1251 = vperm.xlu0 %1250, %v1173
      %v1252 = vpop.permute.xlu0 %1251
      %v1254 = vadd.f32 %v1142, %v1177
      %v1255 = vadd.f32 %v1143, %v1182
      %v1256 = vadd.f32 %v1144, %v1187
      %v1257 = vadd.f32 %v1145, %v1192
      %v1258 = vadd.f32 %v1146, %v1197
      %v1259 = vadd.f32 %v1147, %v1202
      %v1260 = vadd.f32 %v1148, %v1207
      %v1261 = vadd.f32 %v1149, %v1212
      %v1262 = vadd.f32 %v1150, %v1217
      %v1263 = vadd.f32 %v1151, %v1222
      %v1264 = vadd.f32 %v1152, %v1227
      %v1265 = vadd.f32 %v1153, %v1232
      %v1266 = vadd.f32 %v1154, %v1237
      %v1267 = vadd.f32 %v1155, %v1242
      %v1268 = vadd.f32 %v1156, %v1247
      %v1269 = vadd.f32 %v1157, %v1252
      %v1270 = vsub.f32 0.0, %v1254
      %v1271 = vsub.f32 0.0, %v1255
      %v1272 = vsub.f32 0.0, %v1256
      %v1273 = vsub.f32 0.0, %v1257
      %v1274 = vsub.f32 0.0, %v1258
      %v1275 = vsub.f32 0.0, %v1259
      %v1276 = vsub.f32 0.0, %v1260
      %v1277 = vsub.f32 0.0, %v1261
      %v1278 = vsub.f32 0.0, %v1262
      %v1279 = vsub.f32 0.0, %v1263
      %v1280 = vsub.f32 0.0, %v1264
      %v1281 = vsub.f32 0.0, %v1265
      %v1282 = vsub.f32 0.0, %v1266
      %v1283 = vsub.f32 0.0, %v1267
      %v1284 = vsub.f32 0.0, %v1268
      %v1285 = vsub.f32 0.0, %v1269
      %v1286 = vmul.f32 %v1270, 1.442695
      %v1287 = vpow.pop %v1286
      %v1288 = vmul.f32 %v1271, 1.442695
      %v1289 = vpow.pop %v1288
      %v1290 = vmul.f32 %v1272, 1.442695
      %v1291 = vpow.pop %v1290
      %v1292 = vmul.f32 %v1273, 1.442695
      %v1293 = vpow.pop %v1292
      %v1294 = vmul.f32 %v1274, 1.442695
      %v1295 = vpow.pop %v1294
      %v1296 = vmul.f32 %v1275, 1.442695
      %v1297 = vpow.pop %v1296
      %v1298 = vmul.f32 %v1276, 1.442695
      %v1299 = vpow.pop %v1298
      %v1300 = vmul.f32 %v1277, 1.442695
      %v1301 = vpow.pop %v1300
      %v1302 = vmul.f32 %v1278, 1.442695
      %v1303 = vpow.pop %v1302
      %v1304 = vmul.f32 %v1279, 1.442695
      %v1305 = vpow.pop %v1304
      %v1306 = vmul.f32 %v1280, 1.442695
      %v1307 = vpow.pop %v1306
      %v1308 = vmul.f32 %v1281, 1.442695
      %v1309 = vpow.pop %v1308
      %v1310 = vmul.f32 %v1282, 1.442695
      %v1311 = vpow.pop %v1310
      %v1312 = vmul.f32 %v1283, 1.442695
      %v1313 = vpow.pop %v1312
      %v1314 = vmul.f32 %v1284, 1.442695
      %v1315 = vpow.pop %v1314
      %v1316 = vmul.f32 %v1285, 1.442695
      %v1317 = vpow.pop %v1316
      %v1318 = vadd.f32 %v1287, 1.0
      %v1319 = vadd.f32 %v1289, 1.0
      %v1320 = vadd.f32 %v1291, 1.0
      %v1321 = vadd.f32 %v1293, 1.0
      %v1322 = vadd.f32 %v1295, 1.0
      %v1323 = vadd.f32 %v1297, 1.0
      %v1324 = vadd.f32 %v1299, 1.0
      %v1325 = vadd.f32 %v1301, 1.0
      %v1326 = vadd.f32 %v1303, 1.0
      %v1327 = vadd.f32 %v1305, 1.0
      %v1328 = vadd.f32 %v1307, 1.0
      %v1329 = vadd.f32 %v1309, 1.0
      %v1330 = vadd.f32 %v1311, 1.0
      %v1331 = vadd.f32 %v1313, 1.0
      %v1332 = vadd.f32 %v1315, 1.0
      %v1333 = vadd.f32 %v1317, 1.0
      %v1334 = vrcp.pop %v1318
      %v1335 = vrcp.pop %v1319
      %v1336 = vrcp.pop %v1320
      %v1337 = vrcp.pop %v1321
      %v1338 = vrcp.pop %v1322
      %v1339 = vrcp.pop %v1323
      %v1340 = vrcp.pop %v1324
      %v1341 = vrcp.pop %v1325
      %v1342 = vrcp.pop %v1326
      %v1343 = vrcp.pop %v1327
      %v1344 = vrcp.pop %v1328
      %v1345 = vrcp.pop %v1329
      %v1346 = vrcp.pop %v1330
      %v1347 = vrcp.pop %v1331
      %v1348 = vrcp.pop %v1332
      %v1349 = vrcp.pop %v1333
      %v1350 = vmul.f32 %v1254, %v1334
      %v1351 = vmul.f32 %v1255, %v1335
      %v1352 = vmul.f32 %v1256, %v1336
      %v1353 = vmul.f32 %v1257, %v1337
      %v1354 = vmul.f32 %v1258, %v1338
      %v1355 = vmul.f32 %v1259, %v1339
      %v1356 = vmul.f32 %v1260, %v1340
      %v1357 = vmul.f32 %v1261, %v1341
      %v1358 = vmul.f32 %v1262, %v1342
      %v1359 = vmul.f32 %v1263, %v1343
      %v1360 = vmul.f32 %v1264, %v1344
      %v1361 = vmul.f32 %v1265, %v1345
      %v1362 = vmul.f32 %v1266, %v1346
      %v1363 = vmul.f32 %v1267, %v1347
      %v1364 = vmul.f32 %v1268, %v1348
      %v1365 = vmul.f32 %v1269, %v1349
      %v1366 = vpack.c.bf16 %v1351, %v1350
      %v1367 = vpack.c.bf16 %v1353, %v1352
      %v1368 = vpack.c.bf16 %v1355, %v1354
      %v1369 = vpack.c.bf16 %v1357, %v1356
      %v1370 = vpack.c.bf16 %v1359, %v1358
      %v1371 = vpack.c.bf16 %v1361, %v1360
      %v1372 = vpack.c.bf16 %v1363, %v1362
      %v1373 = vpack.c.bf16 %v1365, %v1364
      %v1374 = vld [vmem:[%s5] sm:$0xf]
      %vm1375 = vcmask 64512
      %v1377 = vsel %vm1375, %v1366, 0
      %v1380 = vsel %vm1375, %v1367, 0
      %v1383 = vsel %vm1375, %v1368, 0
      %v1386 = vsel %vm1375, %v1369, 0
      %v1389 = vsel %vm1375, %v1370, 0
      %v1392 = vsel %vm1375, %v1371, 0
      %v1395 = vsel %vm1375, %v1372, 0
      %v1398 = vsel %vm1375, %v1373, 0
      %vm1400 = vcmask 1043456
      %v1402 = vsel %vm1400, %v1374, 0
      %1404 = vmatprep.subr.bf16.mxu0 0
      %1405 = vmatpush1.bf16.msra.mxu0 0
      %1406 = vmatprep.subr.bf16.mxu0 0
      %1407 = vmatpush1.bf16.msra.mxu0 0
      %1408 = vmatprep.subr.bf16.mxu0 0
      %1409 = vmatpush1.bf16.msra.mxu0 0
      %1410 = vmatprep.subr.bf16.mxu0 0
      %1411 = vmatpush1.bf16.msra.mxu0 0
      %1412 = vmatprep.subr.bf16.mxu0 0
      %1413 = vmatpush1.bf16.msra.mxu0 0
      %1414 = vmatprep.subr.bf16.mxu0 0
      %1415 = vmatpush1.bf16.msra.mxu0 0
      %1416 = vmatprep.subr.bf16.mxu0 0
      %1417 = vmatpush1.bf16.msra.mxu0 0
      %1418 = vmatprep.subr.bf16.mxu0 0
      %1419 = vmatpush1.bf16.msra.mxu0 %v1402
      %1420 = vmatprep.subr.bf16.mxu0 0
      %1421 = vmatpush2.bf16.msra.mxu0 0
      %1422 = vmatprep.subr.bf16.mxu0 0
      %1423 = vmatpush2.bf16.msra.mxu0 0
      %1424 = vmatprep.subr.bf16.mxu0 0
      %1425 = vmatpush2.bf16.msra.mxu0 0
      %1426 = vmatprep.subr.bf16.mxu0 0
      %1427 = vmatpush2.bf16.msra.mxu0 0
      %1428 = vmatprep.subr.bf16.mxu0 0
      %1429 = vmatpush2.bf16.msra.mxu0 0
      %1430 = vmatprep.subr.bf16.mxu0 0
      %1431 = vmatpush2.bf16.msra.mxu0 0
      %1432 = vmatprep.subr.bf16.mxu0 0
      %1433 = vmatpush2.bf16.msra.mxu0 0
      %1434 = vmatprep.subr.bf16.mxu0 0
      %1435 = vmatpush2.bf16.msra.mxu0 0
      %1436 = vmatprep.mubr.bf16.mxu0 0
      %1437 = vmatmul.mubr.bf16.gmra.mxu0 %v1377
      %v1438 = vpop.f32.mrf.mxu0
      %v1439 = vadd.f32 0.0, %v1438
      %v1440 = vpop.f32.mrf.mxu0
      %v1441 = vpop.f32.mrf.mxu0
      %v1442 = vadd.f32 0.0, %v1441
      %v1443 = vpop.f32.mrf.mxu0
      %1444 = vmatprep.mubr.bf16.mxu0 0
      %1445 = vmatmul.mubr.bf16.gmra.mxu0 %v1380
      %v1446 = vpop.f32.mrf.mxu0
      %v1447 = vadd.f32 0.0, %v1446
      %v1448 = vpop.f32.mrf.mxu0
      %v1449 = vpop.f32.mrf.mxu0
      %v1450 = vadd.f32 0.0, %v1449
      %v1451 = vpop.f32.mrf.mxu0
      %1452 = vmatprep.mubr.bf16.mxu0 0
      %1453 = vmatmul.mubr.bf16.gmra.mxu0 %v1383
      %v1454 = vpop.f32.mrf.mxu0
      %v1455 = vadd.f32 0.0, %v1454
      %v1456 = vpop.f32.mrf.mxu0
      %v1457 = vpop.f32.mrf.mxu0
      %v1458 = vadd.f32 0.0, %v1457
      %v1459 = vpop.f32.mrf.mxu0
      %1460 = vmatprep.mubr.bf16.mxu0 0
      %1461 = vmatmul.mubr.bf16.gmra.mxu0 %v1386
      %v1462 = vpop.f32.mrf.mxu0
      %v1463 = vadd.f32 0.0, %v1462
      %v1464 = vpop.f32.mrf.mxu0
      %v1465 = vpop.f32.mrf.mxu0
      %v1466 = vadd.f32 0.0, %v1465
      %v1467 = vpop.f32.mrf.mxu0
      %1468 = vmatprep.mubr.bf16.mxu0 0
      %1469 = vmatmul.mubr.bf16.gmra.mxu0 %v1389
      %v1470 = vpop.f32.mrf.mxu0
      %v1471 = vadd.f32 0.0, %v1470
      %v1472 = vpop.f32.mrf.mxu0
      %v1473 = vpop.f32.mrf.mxu0
      %v1474 = vadd.f32 0.0, %v1473
      %v1475 = vpop.f32.mrf.mxu0
      %1476 = vmatprep.mubr.bf16.mxu0 0
      %1477 = vmatmul.mubr.bf16.gmra.mxu0 %v1392
      %v1478 = vpop.f32.mrf.mxu0
      %v1479 = vadd.f32 0.0, %v1478
      %v1480 = vpop.f32.mrf.mxu0
      %v1481 = vpop.f32.mrf.mxu0
      %v1482 = vadd.f32 0.0, %v1481
      %v1483 = vpop.f32.mrf.mxu0
      %1484 = vmatprep.mubr.bf16.mxu0 0
      %1485 = vmatmul.mubr.bf16.gmra.mxu0 %v1395
      %v1486 = vpop.f32.mrf.mxu0
      %v1487 = vadd.f32 0.0, %v1486
      %v1488 = vpop.f32.mrf.mxu0
      %v1489 = vpop.f32.mrf.mxu0
      %v1490 = vadd.f32 0.0, %v1489
      %v1491 = vpop.f32.mrf.mxu0
      %1492 = vmatprep.mubr.bf16.mxu0 0
      %1493 = vmatmul.mubr.bf16.gmra.mxu0 %v1398
      %v1494 = vpop.f32.mrf.mxu0
      %v1495 = vadd.f32 0.0, %v1494
      %v1496 = vpop.f32.mrf.mxu0
      %v1497 = vpop.f32.mrf.mxu0
      %v1498 = vadd.f32 0.0, %v1497
      %v1499 = vpop.f32.mrf.mxu0
      %1500 = vdwg.mxu0
      %v1501 = vpack.c.bf16 %v1442, %v1439
      %v1502 = vpack.c.bf16 %v1450, %v1447
      %v1503 = vpack.c.bf16 %v1458, %v1455
      %v1504 = vpack.c.bf16 %v1466, %v1463
      %v1505 = vpack.c.bf16 %v1474, %v1471
      %v1506 = vpack.c.bf16 %v1482, %v1479
      %v1507 = vpack.c.bf16 %v1490, %v1487
      %v1508 = vpack.c.bf16 %v1498, %v1495
      %v1509 = vld [vmem:[%s4] sm:$0xf]
      %v1510 = vld [vmem:[%s4 + $0x4] sm:$0xf]
      %v1511 = vld [vmem:[%s4 + $0x8] sm:$0xf]
      %v1512 = vld [vmem:[%s4 + $0xc] sm:$0xf]
      %v1513 = vld [vmem:[%s4 + $0x10] sm:$0xf]
      %v1514 = vld [vmem:[%s4 + $0x14] sm:$0xf]
      %v1515 = vld [vmem:[%s4 + $0x18] sm:$0xf]
      %v1516 = vld [vmem:[%s4 + $0x1c] sm:$0xf]
      %v1517 = vld [vmem:[%s4 + $0x20] sm:$0xf]
      %v1518 = vld [vmem:[%s4 + $0x24] sm:$0xf]
      %v1519 = vld [vmem:[%s4 + $0x28] sm:$0xf]
      %v1520 = vld [vmem:[%s4 + $0x2c] sm:$0xf]
      %v1521 = vld [vmem:[%s4 + $0x30] sm:$0xf]
      %v1522 = vld [vmem:[%s4 + $0x34] sm:$0xf]
      %v1523 = vld [vmem:[%s4 + $0x38] sm:$0xf]
      %v1524 = vld [vmem:[%s4 + $0x3c] sm:$0xf]
      %s1525 = scalar_lea.vmem %s5, 4
      %v1526 = vld [vmem:[%s1525] sm:$0xf]
      %v1528 = vsel %vm1400, %v1526, 0
      %1530 = vmatprep.subr.bf16.mxu0 0
      %1531 = vmatpush1.bf16.msra.mxu0 0
      %1532 = vmatprep.subr.bf16.mxu0 0
      %1533 = vmatpush1.bf16.msra.mxu0 0
      %1534 = vmatprep.subr.bf16.mxu0 0
      %1535 = vmatpush1.bf16.msra.mxu0 0
      %1536 = vmatprep.subr.bf16.mxu0 0
      %1537 = vmatpush1.bf16.msra.mxu0 0
      %1538 = vmatprep.subr.bf16.mxu0 0
      %1539 = vmatpush1.bf16.msra.mxu0 0
      %1540 = vmatprep.subr.bf16.mxu0 0
      %1541 = vmatpush1.bf16.msra.mxu0 0
      %1542 = vmatprep.subr.bf16.mxu0 0
      %1543 = vmatpush1.bf16.msra.mxu0 0
      %1544 = vmatprep.subr.bf16.mxu0 0
      %1545 = vmatpush1.bf16.msra.mxu0 %v1528
      %1546 = vmatprep.subr.bf16.mxu0 0
      %1547 = vmatpush2.bf16.msra.mxu0 0
      %1548 = vmatprep.subr.bf16.mxu0 0
      %1549 = vmatpush2.bf16.msra.mxu0 0
      %1550 = vmatprep.subr.bf16.mxu0 0
      %1551 = vmatpush2.bf16.msra.mxu0 0
      %1552 = vmatprep.subr.bf16.mxu0 0
      %1553 = vmatpush2.bf16.msra.mxu0 0
      %1554 = vmatprep.subr.bf16.mxu0 0
      %1555 = vmatpush2.bf16.msra.mxu0 0
      %1556 = vmatprep.subr.bf16.mxu0 0
      %1557 = vmatpush2.bf16.msra.mxu0 0
      %1558 = vmatprep.subr.bf16.mxu0 0
      %1559 = vmatpush2.bf16.msra.mxu0 0
      %1560 = vmatprep.subr.bf16.mxu0 0
      %1561 = vmatpush2.bf16.msra.mxu0 0
      %1562 = vmatprep.mubr.bf16.mxu0 0
      %1563 = vmatmul.mubr.bf16.gmra.mxu0 %v1377
      %v1564 = vpop.f32.mrf.mxu0
      %v1565 = vadd.f32 0.0, %v1564
      %v1566 = vpop.f32.mrf.mxu0
      %v1567 = vpop.f32.mrf.mxu0
      %v1568 = vadd.f32 0.0, %v1567
      %v1569 = vpop.f32.mrf.mxu0
      %1570 = vmatprep.mubr.bf16.mxu0 0
      %1571 = vmatmul.mubr.bf16.gmra.mxu0 %v1380
      %v1572 = vpop.f32.mrf.mxu0
      %v1573 = vadd.f32 0.0, %v1572
      %v1574 = vpop.f32.mrf.mxu0
      %v1575 = vpop.f32.mrf.mxu0
      %v1576 = vadd.f32 0.0, %v1575
      %v1577 = vpop.f32.mrf.mxu0
      %1578 = vmatprep.mubr.bf16.mxu0 0
      %1579 = vmatmul.mubr.bf16.gmra.mxu0 %v1383
      %v1580 = vpop.f32.mrf.mxu0
      %v1581 = vadd.f32 0.0, %v1580
      %v1582 = vpop.f32.mrf.mxu0
      %v1583 = vpop.f32.mrf.mxu0
      %v1584 = vadd.f32 0.0, %v1583
      %v1585 = vpop.f32.mrf.mxu0
      %1586 = vmatprep.mubr.bf16.mxu0 0
      %1587 = vmatmul.mubr.bf16.gmra.mxu0 %v1386
      %v1588 = vpop.f32.mrf.mxu0
      %v1589 = vadd.f32 0.0, %v1588
      %v1590 = vpop.f32.mrf.mxu0
      %v1591 = vpop.f32.mrf.mxu0
      %v1592 = vadd.f32 0.0, %v1591
      %v1593 = vpop.f32.mrf.mxu0
      %1594 = vmatprep.mubr.bf16.mxu0 0
      %1595 = vmatmul.mubr.bf16.gmra.mxu0 %v1389
      %v1596 = vpop.f32.mrf.mxu0
      %v1597 = vadd.f32 0.0, %v1596
      %v1598 = vpop.f32.mrf.mxu0
      %v1599 = vpop.f32.mrf.mxu0
      %v1600 = vadd.f32 0.0, %v1599
      %v1601 = vpop.f32.mrf.mxu0
      %1602 = vmatprep.mubr.bf16.mxu0 0
      %1603 = vmatmul.mubr.bf16.gmra.mxu0 %v1392
      %v1604 = vpop.f32.mrf.mxu0
      %v1605 = vadd.f32 0.0, %v1604
      %v1606 = vpop.f32.mrf.mxu0
      %v1607 = vpop.f32.mrf.mxu0
      %v1608 = vadd.f32 0.0, %v1607
      %v1609 = vpop.f32.mrf.mxu0
      %1610 = vmatprep.mubr.bf16.mxu0 0
      %1611 = vmatmul.mubr.bf16.gmra.mxu0 %v1395
      %v1612 = vpop.f32.mrf.mxu0
      %v1613 = vadd.f32 0.0, %v1612
      %v1614 = vpop.f32.mrf.mxu0
      %v1615 = vpop.f32.mrf.mxu0
      %v1616 = vadd.f32 0.0, %v1615
      %v1617 = vpop.f32.mrf.mxu0
      %1618 = vmatprep.mubr.bf16.mxu0 0
      %1619 = vmatmul.mubr.bf16.gmra.mxu0 %v1398
      %v1620 = vpop.f32.mrf.mxu0
      %v1621 = vadd.f32 0.0, %v1620
      %v1622 = vpop.f32.mrf.mxu0
      %v1623 = vpop.f32.mrf.mxu0
      %v1624 = vadd.f32 0.0, %v1623
      %v1625 = vpop.f32.mrf.mxu0
      %1626 = vdwg.mxu0
      %v1627 = vpack.c.bf16 %v1568, %v1565
      %v1628 = vpack.c.bf16 %v1576, %v1573
      %v1629 = vpack.c.bf16 %v1584, %v1581
      %v1630 = vpack.c.bf16 %v1592, %v1589
      %v1631 = vpack.c.bf16 %v1600, %v1597
      %v1632 = vpack.c.bf16 %v1608, %v1605
      %v1633 = vpack.c.bf16 %v1616, %v1613
      %v1634 = vpack.c.bf16 %v1624, %v1621
      %s1635 = scalar_lea.vmem %s4, 64
      %v1636 = vld [vmem:[%s1635] sm:$0xf]
      %v1637 = vld [vmem:[%s1635 + $0x4] sm:$0xf]
      %v1638 = vld [vmem:[%s1635 + $0x8] sm:$0xf]
      %v1639 = vld [vmem:[%s1635 + $0xc] sm:$0xf]
      %v1640 = vld [vmem:[%s1635 + $0x10] sm:$0xf]
      %v1641 = vld [vmem:[%s1635 + $0x14] sm:$0xf]
      %v1642 = vld [vmem:[%s1635 + $0x18] sm:$0xf]
      %v1643 = vld [vmem:[%s1635 + $0x1c] sm:$0xf]
      %v1644 = vld [vmem:[%s1635 + $0x20] sm:$0xf]
      %v1645 = vld [vmem:[%s1635 + $0x24] sm:$0xf]
      %v1646 = vld [vmem:[%s1635 + $0x28] sm:$0xf]
      %v1647 = vld [vmem:[%s1635 + $0x2c] sm:$0xf]
      %v1648 = vld [vmem:[%s1635 + $0x30] sm:$0xf]
      %v1649 = vld [vmem:[%s1635 + $0x34] sm:$0xf]
      %v1650 = vld [vmem:[%s1635 + $0x38] sm:$0xf]
      %v1651 = vld [vmem:[%s1635 + $0x3c] sm:$0xf]
      %v1668 = vunpack.c.l.b16 %v1636
      %v1669 = vunpack.c.l.b16 %v1637
      %v1670 = vunpack.c.l.b16 %v1638
      %v1671 = vunpack.c.l.b16 %v1639
      %v1672 = vunpack.c.l.b16 %v1640
      %v1673 = vunpack.c.l.b16 %v1641
      %v1674 = vunpack.c.l.b16 %v1642
      %v1675 = vunpack.c.l.b16 %v1643
      %v1676 = vunpack.c.l.b16 %v1644
      %v1677 = vunpack.c.l.b16 %v1645
      %v1678 = vunpack.c.l.b16 %v1646
      %v1679 = vunpack.c.l.b16 %v1647
      %v1680 = vunpack.c.l.b16 %v1648
      %v1681 = vunpack.c.l.b16 %v1649
      %v1682 = vunpack.c.l.b16 %v1650
      %v1683 = vunpack.c.l.b16 %v1651
      %v1684 = vpack.c.b16 %v1669, %v1668
      %v1685 = vpack.c.b16 %v1671, %v1670
      %v1686 = vpack.c.b16 %v1673, %v1672
      %v1687 = vpack.c.b16 %v1675, %v1674
      %v1688 = vpack.c.b16 %v1677, %v1676
      %v1689 = vpack.c.b16 %v1679, %v1678
      %v1690 = vpack.c.b16 %v1681, %v1680
      %v1691 = vpack.c.b16 %v1683, %v1682
      %1700 = vmatprep.subr.bf16.mxu0 0
      %1701 = vmatpush1.bf16.msra.mxu0 %v1634
      %1702 = vmatprep.subr.bf16.mxu0 0
      %1703 = vmatpush1.bf16.msra.mxu0 %v1633
      %1704 = vmatprep.subr.bf16.mxu0 0
      %1705 = vmatpush1.bf16.msra.mxu0 %v1632
      %1706 = vmatprep.subr.bf16.mxu0 0
      %1707 = vmatpush1.bf16.msra.mxu0 %v1631
      %1708 = vmatprep.subr.bf16.mxu0 0
      %1709 = vmatpush1.bf16.msra.mxu0 %v1630
      %1710 = vmatprep.subr.bf16.mxu0 0
      %1711 = vmatpush1.bf16.msra.mxu0 %v1629
      %1712 = vmatprep.subr.bf16.mxu0 0
      %1713 = vmatpush1.bf16.msra.mxu0 %v1628
      %1714 = vmatprep.subr.bf16.mxu0 0
      %1715 = vmatpush1.bf16.msra.mxu0 %v1627
      %1716 = vmatprep.subr.bf16.mxu0 0
      %1717 = vmatpush2.bf16.msra.mxu0 0
      %1718 = vmatprep.subr.bf16.mxu0 0
      %1719 = vmatpush2.bf16.msra.mxu0 0
      %1720 = vmatprep.subr.bf16.mxu0 0
      %1721 = vmatpush2.bf16.msra.mxu0 0
      %1722 = vmatprep.subr.bf16.mxu0 0
      %1723 = vmatpush2.bf16.msra.mxu0 0
      %1724 = vmatprep.subr.bf16.mxu0 0
      %1725 = vmatpush2.bf16.msra.mxu0 0
      %1726 = vmatprep.subr.bf16.mxu0 0
      %1727 = vmatpush2.bf16.msra.mxu0 0
      %1728 = vmatprep.subr.bf16.mxu0 0
      %1729 = vmatpush2.bf16.msra.mxu0 0
      %1730 = vmatprep.subr.bf16.mxu0 0
      %1731 = vmatpush2.bf16.msra.mxu0 0
      %1732 = vmatprep.mubr.bf16.mxu0 0
      %1733 = vmatmul.mubr.bf16.gmra.mxu0 %v1684
      %v1734 = vpop.f32.mrf.mxu0
      %v1735 = vadd.f32 0.0, %v1734
      %v1736 = vpop.f32.mrf.mxu0
      %v1737 = vpop.f32.mrf.mxu0
      %v1738 = vadd.f32 0.0, %v1737
      %v1739 = vpop.f32.mrf.mxu0
      %1740 = vmatprep.mubr.bf16.mxu0 0
      %1741 = vmatmul.mubr.bf16.gmra.mxu0 %v1685
      %v1742 = vpop.f32.mrf.mxu0
      %v1743 = vadd.f32 0.0, %v1742
      %v1744 = vpop.f32.mrf.mxu0
      %v1745 = vpop.f32.mrf.mxu0
      %v1746 = vadd.f32 0.0, %v1745
      %v1747 = vpop.f32.mrf.mxu0
      %1748 = vmatprep.mubr.bf16.mxu0 0
      %1749 = vmatmul.mubr.bf16.gmra.mxu0 %v1686
      %v1750 = vpop.f32.mrf.mxu0
      %v1751 = vadd.f32 0.0, %v1750
      %v1752 = vpop.f32.mrf.mxu0
      %v1753 = vpop.f32.mrf.mxu0
      %v1754 = vadd.f32 0.0, %v1753
      %v1755 = vpop.f32.mrf.mxu0
      %1756 = vmatprep.mubr.bf16.mxu0 0
      %1757 = vmatmul.mubr.bf16.gmra.mxu0 %v1687
      %v1758 = vpop.f32.mrf.mxu0
      %v1759 = vadd.f32 0.0, %v1758
      %v1760 = vpop.f32.mrf.mxu0
      %v1761 = vpop.f32.mrf.mxu0
      %v1762 = vadd.f32 0.0, %v1761
      %v1763 = vpop.f32.mrf.mxu0
      %1764 = vmatprep.mubr.bf16.mxu0 0
      %1765 = vmatmul.mubr.bf16.gmra.mxu0 %v1688
      %v1766 = vpop.f32.mrf.mxu0
      %v1767 = vadd.f32 0.0, %v1766
      %v1768 = vpop.f32.mrf.mxu0
      %v1769 = vpop.f32.mrf.mxu0
      %v1770 = vadd.f32 0.0, %v1769
      %v1771 = vpop.f32.mrf.mxu0
      %1772 = vmatprep.mubr.bf16.mxu0 0
      %1773 = vmatmul.mubr.bf16.gmra.mxu0 %v1689
      %v1774 = vpop.f32.mrf.mxu0
      %v1775 = vadd.f32 0.0, %v1774
      %v1776 = vpop.f32.mrf.mxu0
      %v1777 = vpop.f32.mrf.mxu0
      %v1778 = vadd.f32 0.0, %v1777
      %v1779 = vpop.f32.mrf.mxu0
      %1780 = vmatprep.mubr.bf16.mxu0 0
      %1781 = vmatmul.mubr.bf16.gmra.mxu0 %v1690
      %v1782 = vpop.f32.mrf.mxu0
      %v1783 = vadd.f32 0.0, %v1782
      %v1784 = vpop.f32.mrf.mxu0
      %v1785 = vpop.f32.mrf.mxu0
      %v1786 = vadd.f32 0.0, %v1785
      %v1787 = vpop.f32.mrf.mxu0
      %1788 = vmatprep.mubr.bf16.mxu0 0
      %1789 = vmatmul.mubr.bf16.gmra.mxu0 %v1691
      %v1790 = vpop.f32.mrf.mxu0
      %v1791 = vadd.f32 0.0, %v1790
      %v1792 = vpop.f32.mrf.mxu0
      %v1793 = vpop.f32.mrf.mxu0
      %v1794 = vadd.f32 0.0, %v1793
      %v1795 = vpop.f32.mrf.mxu0
      %1796 = vdwg.mxu0
      %v1813 = vunpack.c.l.b16 %v1509
      %v1814 = vunpack.c.l.b16 %v1510
      %v1815 = vunpack.c.l.b16 %v1511
      %v1816 = vunpack.c.l.b16 %v1512
      %v1817 = vunpack.c.l.b16 %v1513
      %v1818 = vunpack.c.l.b16 %v1514
      %v1819 = vunpack.c.l.b16 %v1515
      %v1820 = vunpack.c.l.b16 %v1516
      %v1821 = vunpack.c.l.b16 %v1517
      %v1822 = vunpack.c.l.b16 %v1518
      %v1823 = vunpack.c.l.b16 %v1519
      %v1824 = vunpack.c.l.b16 %v1520
      %v1825 = vunpack.c.l.b16 %v1521
      %v1826 = vunpack.c.l.b16 %v1522
      %v1827 = vunpack.c.l.b16 %v1523
      %v1828 = vunpack.c.l.b16 %v1524
      %v1829 = vpack.c.b16 %v1814, %v1813
      %v1830 = vpack.c.b16 %v1816, %v1815
      %v1831 = vpack.c.b16 %v1818, %v1817
      %v1832 = vpack.c.b16 %v1820, %v1819
      %v1833 = vpack.c.b16 %v1822, %v1821
      %v1834 = vpack.c.b16 %v1824, %v1823
      %v1835 = vpack.c.b16 %v1826, %v1825
      %v1836 = vpack.c.b16 %v1828, %v1827
      %1845 = vmatprep.subr.bf16.mxu0 0
      %1846 = vmatpush1.bf16.msra.mxu0 %v1508
      %1847 = vmatprep.subr.bf16.mxu0 0
      %1848 = vmatpush1.bf16.msra.mxu0 %v1507
      %1849 = vmatprep.subr.bf16.mxu0 0
      %1850 = vmatpush1.bf16.msra.mxu0 %v1506
      %1851 = vmatprep.subr.bf16.mxu0 0
      %1852 = vmatpush1.bf16.msra.mxu0 %v1505
      %1853 = vmatprep.subr.bf16.mxu0 0
      %1854 = vmatpush1.bf16.msra.mxu0 %v1504
      %1855 = vmatprep.subr.bf16.mxu0 0
      %1856 = vmatpush1.bf16.msra.mxu0 %v1503
      %1857 = vmatprep.subr.bf16.mxu0 0
      %1858 = vmatpush1.bf16.msra.mxu0 %v1502
      %1859 = vmatprep.subr.bf16.mxu0 0
      %1860 = vmatpush1.bf16.msra.mxu0 %v1501
      %1861 = vmatprep.subr.bf16.mxu0 0
      %1862 = vmatpush2.bf16.msra.mxu0 0
      %1863 = vmatprep.subr.bf16.mxu0 0
      %1864 = vmatpush2.bf16.msra.mxu0 0
      %1865 = vmatprep.subr.bf16.mxu0 0
      %1866 = vmatpush2.bf16.msra.mxu0 0
      %1867 = vmatprep.subr.bf16.mxu0 0
      %1868 = vmatpush2.bf16.msra.mxu0 0
      %1869 = vmatprep.subr.bf16.mxu0 0
      %1870 = vmatpush2.bf16.msra.mxu0 0
      %1871 = vmatprep.subr.bf16.mxu0 0
      %1872 = vmatpush2.bf16.msra.mxu0 0
      %1873 = vmatprep.subr.bf16.mxu0 0
      %1874 = vmatpush2.bf16.msra.mxu0 0
      %1875 = vmatprep.subr.bf16.mxu0 0
      %1876 = vmatpush2.bf16.msra.mxu0 0
      %1877 = vmatprep.mubr.bf16.mxu0 0
      %1878 = vmatmul.mubr.bf16.gmra.mxu0 %v1829
      %v1879 = vpop.f32.mrf.mxu0
      %v1880 = vadd.f32 %v1735, %v1879
      %v1881 = vpop.f32.mrf.mxu0
      %v1882 = vpop.f32.mrf.mxu0
      %v1883 = vadd.f32 %v1738, %v1882
      %v1884 = vpop.f32.mrf.mxu0
      %1885 = vmatprep.mubr.bf16.mxu0 0
      %1886 = vmatmul.mubr.bf16.gmra.mxu0 %v1830
      %v1887 = vpop.f32.mrf.mxu0
      %v1888 = vadd.f32 %v1743, %v1887
      %v1889 = vpop.f32.mrf.mxu0
      %v1890 = vpop.f32.mrf.mxu0
      %v1891 = vadd.f32 %v1746, %v1890
      %v1892 = vpop.f32.mrf.mxu0
      %1893 = vmatprep.mubr.bf16.mxu0 0
      %1894 = vmatmul.mubr.bf16.gmra.mxu0 %v1831
      %v1895 = vpop.f32.mrf.mxu0
      %v1896 = vadd.f32 %v1751, %v1895
      %v1897 = vpop.f32.mrf.mxu0
      %v1898 = vpop.f32.mrf.mxu0
      %v1899 = vadd.f32 %v1754, %v1898
      %v1900 = vpop.f32.mrf.mxu0
      %1901 = vmatprep.mubr.bf16.mxu0 0
      %1902 = vmatmul.mubr.bf16.gmra.mxu0 %v1832
      %v1903 = vpop.f32.mrf.mxu0
      %v1904 = vadd.f32 %v1759, %v1903
      %v1905 = vpop.f32.mrf.mxu0
      %v1906 = vpop.f32.mrf.mxu0
      %v1907 = vadd.f32 %v1762, %v1906
      %v1908 = vpop.f32.mrf.mxu0
      %1909 = vmatprep.mubr.bf16.mxu0 0
      %1910 = vmatmul.mubr.bf16.gmra.mxu0 %v1833
      %v1911 = vpop.f32.mrf.mxu0
      %v1912 = vadd.f32 %v1767, %v1911
      %v1913 = vpop.f32.mrf.mxu0
      %v1914 = vpop.f32.mrf.mxu0
      %v1915 = vadd.f32 %v1770, %v1914
      %v1916 = vpop.f32.mrf.mxu0
      %1917 = vmatprep.mubr.bf16.mxu0 0
      %1918 = vmatmul.mubr.bf16.gmra.mxu0 %v1834
      %v1919 = vpop.f32.mrf.mxu0
      %v1920 = vadd.f32 %v1775, %v1919
      %v1921 = vpop.f32.mrf.mxu0
      %v1922 = vpop.f32.mrf.mxu0
      %v1923 = vadd.f32 %v1778, %v1922
      %v1924 = vpop.f32.mrf.mxu0
      %1925 = vmatprep.mubr.bf16.mxu0 0
      %1926 = vmatmul.mubr.bf16.gmra.mxu0 %v1835
      %v1927 = vpop.f32.mrf.mxu0
      %v1928 = vadd.f32 %v1783, %v1927
      %v1929 = vpop.f32.mrf.mxu0
      %v1930 = vpop.f32.mrf.mxu0
      %v1931 = vadd.f32 %v1786, %v1930
      %v1932 = vpop.f32.mrf.mxu0
      %1933 = vmatprep.mubr.bf16.mxu0 0
      %1934 = vmatmul.mubr.bf16.gmra.mxu0 %v1836
      %v1935 = vpop.f32.mrf.mxu0
      %v1936 = vadd.f32 %v1791, %v1935
      %v1937 = vpop.f32.mrf.mxu0
      %v1938 = vpop.f32.mrf.mxu0
      %v1939 = vadd.f32 %v1794, %v1938
      %v1940 = vpop.f32.mrf.mxu0
      %1941 = vdwg.mxu0
      %s1942 = scalar_lea.vmem %s5, 8
      %v1943 = vld [vmem:[%s1942] sm:$0xf]
      %v1945 = vsel %vm1400, %v1943, 0
      %1947 = vmatprep.subr.bf16.mxu0 0
      %1948 = vmatpush1.bf16.msra.mxu0 0
      %1949 = vmatprep.subr.bf16.mxu0 0
      %1950 = vmatpush1.bf16.msra.mxu0 0
      %1951 = vmatprep.subr.bf16.mxu0 0
      %1952 = vmatpush1.bf16.msra.mxu0 0
      %1953 = vmatprep.subr.bf16.mxu0 0
      %1954 = vmatpush1.bf16.msra.mxu0 0
      %1955 = vmatprep.subr.bf16.mxu0 0
      %1956 = vmatpush1.bf16.msra.mxu0 0
      %1957 = vmatprep.subr.bf16.mxu0 0
      %1958 = vmatpush1.bf16.msra.mxu0 0
      %1959 = vmatprep.subr.bf16.mxu0 0
      %1960 = vmatpush1.bf16.msra.mxu0 0
      %1961 = vmatprep.subr.bf16.mxu0 0
      %1962 = vmatpush1.bf16.msra.mxu0 %v1945
      %1963 = vmatprep.subr.bf16.mxu0 0
      %1964 = vmatpush2.bf16.msra.mxu0 0
      %1965 = vmatprep.subr.bf16.mxu0 0
      %1966 = vmatpush2.bf16.msra.mxu0 0
      %1967 = vmatprep.subr.bf16.mxu0 0
      %1968 = vmatpush2.bf16.msra.mxu0 0
      %1969 = vmatprep.subr.bf16.mxu0 0
      %1970 = vmatpush2.bf16.msra.mxu0 0
      %1971 = vmatprep.subr.bf16.mxu0 0
      %1972 = vmatpush2.bf16.msra.mxu0 0
      %1973 = vmatprep.subr.bf16.mxu0 0
      %1974 = vmatpush2.bf16.msra.mxu0 0
      %1975 = vmatprep.subr.bf16.mxu0 0
      %1976 = vmatpush2.bf16.msra.mxu0 0
      %1977 = vmatprep.subr.bf16.mxu0 0
      %1978 = vmatpush2.bf16.msra.mxu0 0
      %1979 = vmatprep.mubr.bf16.mxu0 0
      %1980 = vmatmul.mubr.bf16.gmra.mxu0 %v1377
      %v1981 = vpop.f32.mrf.mxu0
      %v1982 = vadd.f32 0.0, %v1981
      %v1983 = vpop.f32.mrf.mxu0
      %v1984 = vpop.f32.mrf.mxu0
      %v1985 = vadd.f32 0.0, %v1984
      %v1986 = vpop.f32.mrf.mxu0
      %1987 = vmatprep.mubr.bf16.mxu0 0
      %1988 = vmatmul.mubr.bf16.gmra.mxu0 %v1380
      %v1989 = vpop.f32.mrf.mxu0
      %v1990 = vadd.f32 0.0, %v1989
      %v1991 = vpop.f32.mrf.mxu0
      %v1992 = vpop.f32.mrf.mxu0
      %v1993 = vadd.f32 0.0, %v1992
      %v1994 = vpop.f32.mrf.mxu0
      %1995 = vmatprep.mubr.bf16.mxu0 0
      %1996 = vmatmul.mubr.bf16.gmra.mxu0 %v1383
      %v1997 = vpop.f32.mrf.mxu0
      %v1998 = vadd.f32 0.0, %v1997
      %v1999 = vpop.f32.mrf.mxu0
      %v2000 = vpop.f32.mrf.mxu0
      %v2001 = vadd.f32 0.0, %v2000
      %v2002 = vpop.f32.mrf.mxu0
      %2003 = vmatprep.mubr.bf16.mxu0 0
      %2004 = vmatmul.mubr.bf16.gmra.mxu0 %v1386
      %v2005 = vpop.f32.mrf.mxu0
      %v2006 = vadd.f32 0.0, %v2005
      %v2007 = vpop.f32.mrf.mxu0
      %v2008 = vpop.f32.mrf.mxu0
      %v2009 = vadd.f32 0.0, %v2008
      %v2010 = vpop.f32.mrf.mxu0
      %2011 = vmatprep.mubr.bf16.mxu0 0
      %2012 = vmatmul.mubr.bf16.gmra.mxu0 %v1389
      %v2013 = vpop.f32.mrf.mxu0
      %v2014 = vadd.f32 0.0, %v2013
      %v2015 = vpop.f32.mrf.mxu0
      %v2016 = vpop.f32.mrf.mxu0
      %v2017 = vadd.f32 0.0, %v2016
      %v2018 = vpop.f32.mrf.mxu0
      %2019 = vmatprep.mubr.bf16.mxu0 0
      %2020 = vmatmul.mubr.bf16.gmra.mxu0 %v1392
      %v2021 = vpop.f32.mrf.mxu0
      %v2022 = vadd.f32 0.0, %v2021
      %v2023 = vpop.f32.mrf.mxu0
      %v2024 = vpop.f32.mrf.mxu0
      %v2025 = vadd.f32 0.0, %v2024
      %v2026 = vpop.f32.mrf.mxu0
      %2027 = vmatprep.mubr.bf16.mxu0 0
      %2028 = vmatmul.mubr.bf16.gmra.mxu0 %v1395
      %v2029 = vpop.f32.mrf.mxu0
      %v2030 = vadd.f32 0.0, %v2029
      %v2031 = vpop.f32.mrf.mxu0
      %v2032 = vpop.f32.mrf.mxu0
      %v2033 = vadd.f32 0.0, %v2032
      %v2034 = vpop.f32.mrf.mxu0
      %2035 = vmatprep.mubr.bf16.mxu0 0
      %2036 = vmatmul.mubr.bf16.gmra.mxu0 %v1398
      %v2037 = vpop.f32.mrf.mxu0
      %v2038 = vadd.f32 0.0, %v2037
      %v2039 = vpop.f32.mrf.mxu0
      %v2040 = vpop.f32.mrf.mxu0
      %v2041 = vadd.f32 0.0, %v2040
      %v2042 = vpop.f32.mrf.mxu0
      %2043 = vdwg.mxu0
      %v2044 = vpack.c.bf16 %v1985, %v1982
      %v2045 = vpack.c.bf16 %v1993, %v1990
      %v2046 = vpack.c.bf16 %v2001, %v1998
      %v2047 = vpack.c.bf16 %v2009, %v2006
      %v2048 = vpack.c.bf16 %v2017, %v2014
      %v2049 = vpack.c.bf16 %v2025, %v2022
      %v2050 = vpack.c.bf16 %v2033, %v2030
      %v2051 = vpack.c.bf16 %v2041, %v2038
      %s2052 = scalar_lea.vmem %s4, 128
      %v2053 = vld [vmem:[%s2052] sm:$0xf]
      %v2054 = vld [vmem:[%s2052 + $0x4] sm:$0xf]
      %v2055 = vld [vmem:[%s2052 + $0x8] sm:$0xf]
      %v2056 = vld [vmem:[%s2052 + $0xc] sm:$0xf]
      %v2057 = vld [vmem:[%s2052 + $0x10] sm:$0xf]
      %v2058 = vld [vmem:[%s2052 + $0x14] sm:$0xf]
      %v2059 = vld [vmem:[%s2052 + $0x18] sm:$0xf]
      %v2060 = vld [vmem:[%s2052 + $0x1c] sm:$0xf]
      %v2061 = vld [vmem:[%s2052 + $0x20] sm:$0xf]
      %v2062 = vld [vmem:[%s2052 + $0x24] sm:$0xf]
      %v2063 = vld [vmem:[%s2052 + $0x28] sm:$0xf]
      %v2064 = vld [vmem:[%s2052 + $0x2c] sm:$0xf]
      %v2065 = vld [vmem:[%s2052 + $0x30] sm:$0xf]
      %v2066 = vld [vmem:[%s2052 + $0x34] sm:$0xf]
      %v2067 = vld [vmem:[%s2052 + $0x38] sm:$0xf]
      %v2068 = vld [vmem:[%s2052 + $0x3c] sm:$0xf]
      %v2085 = vunpack.c.l.b16 %v2053
      %v2086 = vunpack.c.l.b16 %v2054
      %v2087 = vunpack.c.l.b16 %v2055
      %v2088 = vunpack.c.l.b16 %v2056
      %v2089 = vunpack.c.l.b16 %v2057
      %v2090 = vunpack.c.l.b16 %v2058
      %v2091 = vunpack.c.l.b16 %v2059
      %v2092 = vunpack.c.l.b16 %v2060
      %v2093 = vunpack.c.l.b16 %v2061
      %v2094 = vunpack.c.l.b16 %v2062
      %v2095 = vunpack.c.l.b16 %v2063
      %v2096 = vunpack.c.l.b16 %v2064
      %v2097 = vunpack.c.l.b16 %v2065
      %v2098 = vunpack.c.l.b16 %v2066
      %v2099 = vunpack.c.l.b16 %v2067
      %v2100 = vunpack.c.l.b16 %v2068
      %v2101 = vpack.c.b16 %v2086, %v2085
      %v2102 = vpack.c.b16 %v2088, %v2087
      %v2103 = vpack.c.b16 %v2090, %v2089
      %v2104 = vpack.c.b16 %v2092, %v2091
      %v2105 = vpack.c.b16 %v2094, %v2093
      %v2106 = vpack.c.b16 %v2096, %v2095
      %v2107 = vpack.c.b16 %v2098, %v2097
      %v2108 = vpack.c.b16 %v2100, %v2099
      %2117 = vmatprep.subr.bf16.mxu0 0
      %2118 = vmatpush1.bf16.msra.mxu0 %v2051
      %2119 = vmatprep.subr.bf16.mxu0 0
      %2120 = vmatpush1.bf16.msra.mxu0 %v2050
      %2121 = vmatprep.subr.bf16.mxu0 0
      %2122 = vmatpush1.bf16.msra.mxu0 %v2049
      %2123 = vmatprep.subr.bf16.mxu0 0
      %2124 = vmatpush1.bf16.msra.mxu0 %v2048
      %2125 = vmatprep.subr.bf16.mxu0 0
      %2126 = vmatpush1.bf16.msra.mxu0 %v2047
      %2127 = vmatprep.subr.bf16.mxu0 0
      %2128 = vmatpush1.bf16.msra.mxu0 %v2046
      %2129 = vmatprep.subr.bf16.mxu0 0
      %2130 = vmatpush1.bf16.msra.mxu0 %v2045
      %2131 = vmatprep.subr.bf16.mxu0 0
      %2132 = vmatpush1.bf16.msra.mxu0 %v2044
      %2133 = vmatprep.subr.bf16.mxu0 0
      %2134 = vmatpush2.bf16.msra.mxu0 0
      %2135 = vmatprep.subr.bf16.mxu0 0
      %2136 = vmatpush2.bf16.msra.mxu0 0
      %2137 = vmatprep.subr.bf16.mxu0 0
      %2138 = vmatpush2.bf16.msra.mxu0 0
      %2139 = vmatprep.subr.bf16.mxu0 0
      %2140 = vmatpush2.bf16.msra.mxu0 0
      %2141 = vmatprep.subr.bf16.mxu0 0
      %2142 = vmatpush2.bf16.msra.mxu0 0
      %2143 = vmatprep.subr.bf16.mxu0 0
      %2144 = vmatpush2.bf16.msra.mxu0 0
      %2145 = vmatprep.subr.bf16.mxu0 0
      %2146 = vmatpush2.bf16.msra.mxu0 0
      %2147 = vmatprep.subr.bf16.mxu0 0
      %2148 = vmatpush2.bf16.msra.mxu0 0
      %2149 = vmatprep.mubr.bf16.mxu0 0
      %2150 = vmatmul.mubr.bf16.gmra.mxu0 %v2101
      %v2151 = vpop.f32.mrf.mxu0
      %v2152 = vadd.f32 0.0, %v2151
      %v2153 = vpop.f32.mrf.mxu0
      %v2154 = vpop.f32.mrf.mxu0
      %v2155 = vadd.f32 0.0, %v2154
      %v2156 = vpop.f32.mrf.mxu0
      %2157 = vmatprep.mubr.bf16.mxu0 0
      %2158 = vmatmul.mubr.bf16.gmra.mxu0 %v2102
      %v2159 = vpop.f32.mrf.mxu0
      %v2160 = vadd.f32 0.0, %v2159
      %v2161 = vpop.f32.mrf.mxu0
      %v2162 = vpop.f32.mrf.mxu0
      %v2163 = vadd.f32 0.0, %v2162
      %v2164 = vpop.f32.mrf.mxu0
      %2165 = vmatprep.mubr.bf16.mxu0 0
      %2166 = vmatmul.mubr.bf16.gmra.mxu0 %v2103
      %v2167 = vpop.f32.mrf.mxu0
      %v2168 = vadd.f32 0.0, %v2167
      %v2169 = vpop.f32.mrf.mxu0
      %v2170 = vpop.f32.mrf.mxu0
      %v2171 = vadd.f32 0.0, %v2170
      %v2172 = vpop.f32.mrf.mxu0
      %2173 = vmatprep.mubr.bf16.mxu0 0
      %2174 = vmatmul.mubr.bf16.gmra.mxu0 %v2104
      %v2175 = vpop.f32.mrf.mxu0
      %v2176 = vadd.f32 0.0, %v2175
      %v2177 = vpop.f32.mrf.mxu0
      %v2178 = vpop.f32.mrf.mxu0
      %v2179 = vadd.f32 0.0, %v2178
      %v2180 = vpop.f32.mrf.mxu0
      %2181 = vmatprep.mubr.bf16.mxu0 0
      %2182 = vmatmul.mubr.bf16.gmra.mxu0 %v2105
      %v2183 = vpop.f32.mrf.mxu0
      %v2184 = vadd.f32 0.0, %v2183
      %v2185 = vpop.f32.mrf.mxu0
      %v2186 = vpop.f32.mrf.mxu0
      %v2187 = vadd.f32 0.0, %v2186
      %v2188 = vpop.f32.mrf.mxu0
      %2189 = vmatprep.mubr.bf16.mxu0 0
      %2190 = vmatmul.mubr.bf16.gmra.mxu0 %v2106
      %v2191 = vpop.f32.mrf.mxu0
      %v2192 = vadd.f32 0.0, %v2191
      %v2193 = vpop.f32.mrf.mxu0
      %v2194 = vpop.f32.mrf.mxu0
      %v2195 = vadd.f32 0.0, %v2194
      %v2196 = vpop.f32.mrf.mxu0
      %2197 = vmatprep.mubr.bf16.mxu0 0
      %2198 = vmatmul.mubr.bf16.gmra.mxu0 %v2107
      %v2199 = vpop.f32.mrf.mxu0
      %v2200 = vadd.f32 0.0, %v2199
      %v2201 = vpop.f32.mrf.mxu0
      %v2202 = vpop.f32.mrf.mxu0
      %v2203 = vadd.f32 0.0, %v2202
      %v2204 = vpop.f32.mrf.mxu0
      %2205 = vmatprep.mubr.bf16.mxu0 0
      %2206 = vmatmul.mubr.bf16.gmra.mxu0 %v2108
      %v2207 = vpop.f32.mrf.mxu0
      %v2208 = vadd.f32 0.0, %v2207
      %v2209 = vpop.f32.mrf.mxu0
      %v2210 = vpop.f32.mrf.mxu0
      %v2211 = vadd.f32 0.0, %v2210
      %v2212 = vpop.f32.mrf.mxu0
      %2213 = vdwg.mxu0
      %v2214 = vadd.f32 %v1880, %v2152
      %v2215 = vadd.f32 %v1883, %v2155
      %v2216 = vadd.f32 %v1888, %v2160
      %v2217 = vadd.f32 %v1891, %v2163
      %v2218 = vadd.f32 %v1896, %v2168
      %v2219 = vadd.f32 %v1899, %v2171
      %v2220 = vadd.f32 %v1904, %v2176
      %v2221 = vadd.f32 %v1907, %v2179
      %v2222 = vadd.f32 %v1912, %v2184
      %v2223 = vadd.f32 %v1915, %v2187
      %v2224 = vadd.f32 %v1920, %v2192
      %v2225 = vadd.f32 %v1923, %v2195
      %v2226 = vadd.f32 %v1928, %v2200
      %v2227 = vadd.f32 %v1931, %v2203
      %v2228 = vadd.f32 %v1936, %v2208
      %v2229 = vadd.f32 %v1939, %v2211
      %v2230 = vld [vmem:[%s6] sm:$0xff]
      %v2231 = vld [vmem:[%s6 + $0x8] sm:$0xff]
      %v2232 = vld [vmem:[%s6 + $0x10] sm:$0xff]
      %v2233 = vld [vmem:[%s6 + $0x18] sm:$0xff]
      %v2234 = vld [vmem:[%s6 + $0x20] sm:$0xff]
      %v2235 = vld [vmem:[%s6 + $0x28] sm:$0xff]
      %v2236 = vld [vmem:[%s6 + $0x30] sm:$0xff]
      %v2237 = vld [vmem:[%s6 + $0x38] sm:$0xff]
      %v2238 = vld [vmem:[%s6 + $0x40] sm:$0xff]
      %v2239 = vld [vmem:[%s6 + $0x48] sm:$0xff]
      %v2240 = vld [vmem:[%s6 + $0x50] sm:$0xff]
      %v2241 = vld [vmem:[%s6 + $0x58] sm:$0xff]
      %v2242 = vld [vmem:[%s6 + $0x60] sm:$0xff]
      %v2243 = vld [vmem:[%s6 + $0x68] sm:$0xff]
      %v2244 = vld [vmem:[%s6 + $0x70] sm:$0xff]
      %v2245 = vld [vmem:[%s6 + $0x78] sm:$0xff]
      %2247 = vset.pattern.permute.xlu0 0
      %2248 = vperm.xlu0 %2247, %v2230
      %v2249 = vpop.permute.xlu0 %2248
      %2252 = vset.pattern.permute.xlu0 0
      %2253 = vperm.xlu0 %2252, %v2231
      %v2254 = vpop.permute.xlu0 %2253
      %2257 = vset.pattern.permute.xlu0 0
      %2258 = vperm.xlu0 %2257, %v2232
      %v2259 = vpop.permute.xlu0 %2258
      %2262 = vset.pattern.permute.xlu0 0
      %2263 = vperm.xlu0 %2262, %v2233
      %v2264 = vpop.permute.xlu0 %2263
      %2267 = vset.pattern.permute.xlu0 0
      %2268 = vperm.xlu0 %2267, %v2234
      %v2269 = vpop.permute.xlu0 %2268
      %2272 = vset.pattern.permute.xlu0 0
      %2273 = vperm.xlu0 %2272, %v2235
      %v2274 = vpop.permute.xlu0 %2273
      %2277 = vset.pattern.permute.xlu0 0
      %2278 = vperm.xlu0 %2277, %v2236
      %v2279 = vpop.permute.xlu0 %2278
      %2282 = vset.pattern.permute.xlu0 0
      %2283 = vperm.xlu0 %2282, %v2237
      %v2284 = vpop.permute.xlu0 %2283
      %2287 = vset.pattern.permute.xlu0 0
      %2288 = vperm.xlu0 %2287, %v2238
      %v2289 = vpop.permute.xlu0 %2288
      %2292 = vset.pattern.permute.xlu0 0
      %2293 = vperm.xlu0 %2292, %v2239
      %v2294 = vpop.permute.xlu0 %2293
      %2297 = vset.pattern.permute.xlu0 0
      %2298 = vperm.xlu0 %2297, %v2240
      %v2299 = vpop.permute.xlu0 %2298
      %2302 = vset.pattern.permute.xlu0 0
      %2303 = vperm.xlu0 %2302, %v2241
      %v2304 = vpop.permute.xlu0 %2303
      %2307 = vset.pattern.permute.xlu0 0
      %2308 = vperm.xlu0 %2307, %v2242
      %v2309 = vpop.permute.xlu0 %2308
      %2312 = vset.pattern.permute.xlu0 0
      %2313 = vperm.xlu0 %2312, %v2243
      %v2314 = vpop.permute.xlu0 %2313
      %2317 = vset.pattern.permute.xlu0 0
      %2318 = vperm.xlu0 %2317, %v2244
      %v2319 = vpop.permute.xlu0 %2318
      %2322 = vset.pattern.permute.xlu0 0
      %2323 = vperm.xlu0 %2322, %v2245
      %v2324 = vpop.permute.xlu0 %2323
      %v2326 = vadd.f32 %v2214, %v2249
      %v2327 = vadd.f32 %v2215, %v2254
      %v2328 = vadd.f32 %v2216, %v2259
      %v2329 = vadd.f32 %v2217, %v2264
      %v2330 = vadd.f32 %v2218, %v2269
      %v2331 = vadd.f32 %v2219, %v2274
      %v2332 = vadd.f32 %v2220, %v2279
      %v2333 = vadd.f32 %v2221, %v2284
      %v2334 = vadd.f32 %v2222, %v2289
      %v2335 = vadd.f32 %v2223, %v2294
      %v2336 = vadd.f32 %v2224, %v2299
      %v2337 = vadd.f32 %v2225, %v2304
      %v2338 = vadd.f32 %v2226, %v2309
      %v2339 = vadd.f32 %v2227, %v2314
      %v2340 = vadd.f32 %v2228, %v2319
      %v2341 = vadd.f32 %v2229, %v2324
      %v2342 = vsub.f32 0.0, %v2326
      %v2343 = vsub.f32 0.0, %v2327
      %v2344 = vsub.f32 0.0, %v2328
      %v2345 = vsub.f32 0.0, %v2329
      %v2346 = vsub.f32 0.0, %v2330
      %v2347 = vsub.f32 0.0, %v2331
      %v2348 = vsub.f32 0.0, %v2332
      %v2349 = vsub.f32 0.0, %v2333
      %v2350 = vsub.f32 0.0, %v2334
      %v2351 = vsub.f32 0.0, %v2335
      %v2352 = vsub.f32 0.0, %v2336
      %v2353 = vsub.f32 0.0, %v2337
      %v2354 = vsub.f32 0.0, %v2338
      %v2355 = vsub.f32 0.0, %v2339
      %v2356 = vsub.f32 0.0, %v2340
      %v2357 = vsub.f32 0.0, %v2341
      %v2358 = vmul.f32 %v2342, 1.442695
      %v2359 = vpow.pop %v2358
      %v2360 = vmul.f32 %v2343, 1.442695
      %v2361 = vpow.pop %v2360
      %v2362 = vmul.f32 %v2344, 1.442695
      %v2363 = vpow.pop %v2362
      %v2364 = vmul.f32 %v2345, 1.442695
      %v2365 = vpow.pop %v2364
      %v2366 = vmul.f32 %v2346, 1.442695
      %v2367 = vpow.pop %v2366
      %v2368 = vmul.f32 %v2347, 1.442695
      %v2369 = vpow.pop %v2368
      %v2370 = vmul.f32 %v2348, 1.442695
      %v2371 = vpow.pop %v2370
      %v2372 = vmul.f32 %v2349, 1.442695
      %v2373 = vpow.pop %v2372
      %v2374 = vmul.f32 %v2350, 1.442695
      %v2375 = vpow.pop %v2374
      %v2376 = vmul.f32 %v2351, 1.442695
      %v2377 = vpow.pop %v2376
      %v2378 = vmul.f32 %v2352, 1.442695
      %v2379 = vpow.pop %v2378
      %v2380 = vmul.f32 %v2353, 1.442695
      %v2381 = vpow.pop %v2380
      %v2382 = vmul.f32 %v2354, 1.442695
      %v2383 = vpow.pop %v2382
      %v2384 = vmul.f32 %v2355, 1.442695
      %v2385 = vpow.pop %v2384
      %v2386 = vmul.f32 %v2356, 1.442695
      %v2387 = vpow.pop %v2386
      %v2388 = vmul.f32 %v2357, 1.442695
      %v2389 = vpow.pop %v2388
      %v2390 = vadd.f32 %v2359, 1.0
      %v2391 = vadd.f32 %v2361, 1.0
      %v2392 = vadd.f32 %v2363, 1.0
      %v2393 = vadd.f32 %v2365, 1.0
      %v2394 = vadd.f32 %v2367, 1.0
      %v2395 = vadd.f32 %v2369, 1.0
      %v2396 = vadd.f32 %v2371, 1.0
      %v2397 = vadd.f32 %v2373, 1.0
      %v2398 = vadd.f32 %v2375, 1.0
      %v2399 = vadd.f32 %v2377, 1.0
      %v2400 = vadd.f32 %v2379, 1.0
      %v2401 = vadd.f32 %v2381, 1.0
      %v2402 = vadd.f32 %v2383, 1.0
      %v2403 = vadd.f32 %v2385, 1.0
      %v2404 = vadd.f32 %v2387, 1.0
      %v2405 = vadd.f32 %v2389, 1.0
      %v2406 = vrcp.pop %v2390
      %v2407 = vrcp.pop %v2391
      %v2408 = vrcp.pop %v2392
      %v2409 = vrcp.pop %v2393
      %v2410 = vrcp.pop %v2394
      %v2411 = vrcp.pop %v2395
      %v2412 = vrcp.pop %v2396
      %v2413 = vrcp.pop %v2397
      %v2414 = vrcp.pop %v2398
      %v2415 = vrcp.pop %v2399
      %v2416 = vrcp.pop %v2400
      %v2417 = vrcp.pop %v2401
      %v2418 = vrcp.pop %v2402
      %v2419 = vrcp.pop %v2403
      %v2420 = vrcp.pop %v2404
      %v2421 = vrcp.pop %v2405
      %v2422 = vmul.f32 %v2326, %v2406
      %v2423 = vmul.f32 %v2327, %v2407
      %v2424 = vmul.f32 %v2328, %v2408
      %v2425 = vmul.f32 %v2329, %v2409
      %v2426 = vmul.f32 %v2330, %v2410
      %v2427 = vmul.f32 %v2331, %v2411
      %v2428 = vmul.f32 %v2332, %v2412
      %v2429 = vmul.f32 %v2333, %v2413
      %v2430 = vmul.f32 %v2334, %v2414
      %v2431 = vmul.f32 %v2335, %v2415
      %v2432 = vmul.f32 %v2336, %v2416
      %v2433 = vmul.f32 %v2337, %v2417
      %v2434 = vmul.f32 %v2338, %v2418
      %v2435 = vmul.f32 %v2339, %v2419
      %v2436 = vmul.f32 %v2340, %v2420
      %v2437 = vmul.f32 %v2341, %v2421
      %v2438 = vpack.c.bf16 %v2423, %v2422
      %v2439 = vpack.c.bf16 %v2425, %v2424
      %v2440 = vpack.c.bf16 %v2427, %v2426
      %v2441 = vpack.c.bf16 %v2429, %v2428
      %v2442 = vpack.c.bf16 %v2431, %v2430
      %v2443 = vpack.c.bf16 %v2433, %v2432
      %v2444 = vpack.c.bf16 %v2435, %v2434
      %v2445 = vpack.c.bf16 %v2437, %v2436
      %v2446 = vld [vmem:[%s7] sm:$0xf]
      %v2447 = vld [vmem:[%s7 + $0x4] sm:$0xf]
      %v2448 = vld [vmem:[%s7 + $0x8] sm:$0xf]
      %v2449 = vld [vmem:[%s8] sm:$0xff]
      %v2450 = vld [vmem:[%s8 + $0x8] sm:$0xff]
      %v2451 = vld [vmem:[%s8 + $0x10] sm:$0xff]
      %2453 = vset.pattern.permute.xlu0 0
      %2454 = vperm.xlu0 %2453, %v2449
      %v2455 = vpop.permute.xlu0 %2454
      %2458 = vset.pattern.permute.xlu0 0
      %2459 = vperm.xlu0 %2458, %v2450
      %v2460 = vpop.permute.xlu0 %2459
      %2463 = vset.pattern.permute.xlu0 0
      %2464 = vperm.xlu0 %2463, %v2451
      %v2465 = vpop.permute.xlu0 %2464
      %v2470 = vunpack.c.l.b16 %v2446
      %v2471 = vunpack.c.l.b16 %v2447
      %v2472 = vunpack.c.l.b16 %v2448
      %v2473 = vpack.c.b16 %v2471, %v2470
      %v2474 = vpack.c.b16 %v2472, %v2472
      %2477 = vmatprep.subr.bf16.mxu0 0
      %2478 = vmatpush1.bf16.msra.mxu0 %v2445
      %2479 = vmatprep.subr.bf16.mxu0 0
      %2480 = vmatpush1.bf16.msra.mxu0 %v2444
      %2481 = vmatprep.subr.bf16.mxu0 0
      %2482 = vmatpush1.bf16.msra.mxu0 %v2443
      %2483 = vmatprep.subr.bf16.mxu0 0
      %2484 = vmatpush1.bf16.msra.mxu0 %v2442
      %2485 = vmatprep.subr.bf16.mxu0 0
      %2486 = vmatpush1.bf16.msra.mxu0 %v2441
      %2487 = vmatprep.subr.bf16.mxu0 0
      %2488 = vmatpush1.bf16.msra.mxu0 %v2440
      %2489 = vmatprep.subr.bf16.mxu0 0
      %2490 = vmatpush1.bf16.msra.mxu0 %v2439
      %2491 = vmatprep.subr.bf16.mxu0 0
      %2492 = vmatpush1.bf16.msra.mxu0 %v2438
      %2493 = vmatprep.subr.bf16.mxu0 0
      %2494 = vmatpush2.bf16.msra.mxu0 0
      %2495 = vmatprep.subr.bf16.mxu0 0
      %2496 = vmatpush2.bf16.msra.mxu0 0
      %2497 = vmatprep.subr.bf16.mxu0 0
      %2498 = vmatpush2.bf16.msra.mxu0 0
      %2499 = vmatprep.subr.bf16.mxu0 0
      %2500 = vmatpush2.bf16.msra.mxu0 0
      %2501 = vmatprep.subr.bf16.mxu0 0
      %2502 = vmatpush2.bf16.msra.mxu0 0
      %2503 = vmatprep.subr.bf16.mxu0 0
      %2504 = vmatpush2.bf16.msra.mxu0 0
      %2505 = vmatprep.subr.bf16.mxu0 0
      %2506 = vmatpush2.bf16.msra.mxu0 0
      %2507 = vmatprep.subr.bf16.mxu0 0
      %2508 = vmatpush2.bf16.msra.mxu0 0
      %2509 = vmatprep.mubr.bf16.mxu0 0
      %2510 = vmatmul.mubr.bf16.gmra.mxu0 %v2473
      %v2511 = vpop.f32.mrf.mxu0
      %v2512 = vadd.f32 %v2455, %v2511
      %v2513 = vpop.f32.mrf.mxu0
      %v2514 = vpop.f32.mrf.mxu0
      %v2515 = vadd.f32 %v2460, %v2514
      %v2516 = vpop.f32.mrf.mxu0
      %2517 = vmatprep.mubr.bf16.mxu0 0
      %2518 = vmatmul.mubr.bf16.gmra.mxu0 %v2474
      %v2519 = vpop.f32.mrf.mxu0
      %v2520 = vadd.f32 %v2465, %v2519
      %v2521 = vpop.f32.mrf.mxu0
      %v2522 = vpop.f32.mrf.mxu0
      %v2523 = vpop.f32.mrf.mxu0
      %2524 = vdwg.mxu0
      %vm2525 = vcmask 31744
      %2526 = vst.msk [vmem:[%s332] sm:$0xff] %vm2525, %v2512
      %2527 = vst.msk [vmem:[%s332 + $0x8] sm:$0xff] %vm2525, %v2515
      %2528 = vst.msk [vmem:[%s332 + $0x10] sm:$0xff] %vm2525, %v2520
      %p2529 = scmp.lt.s32.totalorder %s20, 1
      %s2530 = scalar_select %p2529, %s20, 1
      %s2531 = smul.addr %s2530, 3
      %s2532 = smul.addr %s2531, 8
      %s2533 = scalar_lea.vmem %s9, %s2532
      // Predicated region
      $region57: #{tpu_custom_call.1} parent=55 // pred_check
        %p2534 = pneg %p232
      $region58: #{tpu_custom_call.1} parent=55 // pred_check_branch
        %2536 = sbr.rel (%p2534) target = $region60
      $region59: #{tpu_custom_call.1} parent=55 // pred_region
        _
      $region60: #{tpu_custom_call.1} parent=55 // pred_fallthru
        _
    $region56: #{tpu_custom_call.1} parent=5 // pred_fallthru
      _
    %p2537 = scmp.le.s32.totalorder 2, %s15
    // Predicated region
    $region61: #{tpu_custom_call.1} parent=5 // pred_check
      %p2538 = pneg %p2537
    $region62: #{tpu_custom_call.1} parent=5 // pred_check_branch
      %2540 = sbr.rel (%p2538) target = $region64
    $region63: #{tpu_custom_call.1} parent=5 // pred_region
      %s2541 = ssub.s32 %s15, 2
      // Predicated region
      $region65: #{tpu_custom_call.1} parent=63 // pred_check
        %p2542 = pneg %p238
      $region66: #{tpu_custom_call.1} parent=63 // pred_check_branch
        %2544 = sbr.rel (%p2542) target = $region68
      $region67: #{tpu_custom_call.1} parent=63 // pred_region
        %p2545 = scmp.lt.s32.totalorder %s21, 1
        %s2546 = scalar_select %p2545, %s21, 1
        %s2547 = smul.addr %s2546, 3
        %s2548 = smul.addr %s2547, 8
        %s2549 = scalar_lea.vmem %s9, %s2548
      $region68: #{tpu_custom_call.1} parent=63 // pred_fallthru
        _
    $region64: #{tpu_custom_call.1} parent=5 // pred_fallthru
      _
  $region6: #{tpu_custom_call.1} parent=0 // loop_footer
    %s19 = sadd.s32 1, %s15
  $region7: #{tpu_custom_call.1} parent=0 // loop_footer_branch
    %14 = sbr.rel target = $region3
  $region8: #{tpu_custom_call.1} parent=0 // loop_exit
    _

</llo_original>
